<compile_context>
chip_gen: v7x
topology: tpu7x:2x2x1
jax: 0.10.0
libtpu: 0.0.40
codegen_flags: <defaults>
</compile_context>

<pallas_src>
import jax
import jax.numpy as jnp
from jax.experimental import pallas as pl
from jax.experimental.pallas import tpu as pltpu


# ----------------------------------------------------------------------------
# Fused Pallas kernel
# ----------------------------------------------------------------------------
def fused_kernel(blkadj_ref, addmask_ref, feat_ref, ginmask_ref,
                 gw1_ref, gb1_ref, gw2_ref, qb2_ref, db2_ref,
                 gatw_ref, asrc_ref, adst_ref,
                 wq_ref, wd_ref, b12_ref,
                 w3_ref, b3_ref, w4_ref, b4_ref,
                 pred_ref, qx_ref, dx_ref,
                 cat_ref):
    f32 = jnp.float32
    nqp = qx_ref.shape[0]
    ndp = dx_ref.shape[0]
    d = qx_ref.shape[1]
    dh = w3_ref.shape[1]

    x_all = feat_ref[...]                                 # (N, F)
    adj = blkadj_ref[...]                                 # (N, N) block-diag (A+I)

    # ---- query + data GIN in one batched pass (eps=0) -----------------------
    agg1 = jnp.dot(adj, x_all, preferred_element_type=f32)
    h1 = jnp.maximum(jnp.dot(agg1, gw1_ref[...], preferred_element_type=f32)
                     + gb1_ref[...], 0.0)
    h1 = h1 * ginmask_ref[...]             # zero the other graph's hidden columns
    agg2 = jnp.dot(adj, h1, preferred_element_type=f32)
    pre2 = jnp.dot(agg2, gw2_ref[...], preferred_element_type=f32)
    query_x = jnp.maximum(pre2[:nqp, :] + qb2_ref[...], 0.0)
    data_x = jnp.maximum(pre2[nqp:, :] + db2_ref[...], 0.0)
    qx_ref[...] = query_x
    dx_ref[...] = data_x

    # ---- single-head dense GAT over the joint (query + data) graph ----------
    z = jnp.dot(x_all, gatw_ref[...], preferred_element_type=f32)        # (N, D)
    e_src = jnp.sum(z * asrc_ref[...], axis=-1, keepdims=True)           # (N, 1)
    e_dst = jnp.sum(z * adst_ref[...], axis=-1, keepdims=True)           # (N, 1)
    e = e_src + e_dst.T                                                  # (N, N)
    e = jnp.where(e > 0.0, e, 0.2 * e)                                   # LeakyReLU(0.2)
    e = e + addmask_ref[...]                                             # additive mask
    e = e - jnp.max(e, axis=-1, keepdims=True)
    p = jnp.exp(e)                                                       # masked -> 0
    denom = jnp.maximum(jnp.sum(p, axis=-1, keepdims=True), 1e-30)       # guard
    alpha = p * pl.reciprocal(denom, approx=True)                        # EUP vrcp
    gat_x = jnp.dot(alpha, z, preferred_element_type=f32)                # (N, D)

    # ---- pairwise head: [gin | gat] assembled in scratch, folded L1+L2 ------
    cat_ref[:nqp, :d] = query_x
    cat_ref[nqp:, :d] = data_x
    cat_ref[:, d:] = gat_x
    hq = jnp.dot(cat_ref[:nqp, :], wq_ref[...], preferred_element_type=f32)   # (nq, D)
    hd = (jnp.dot(cat_ref[nqp:, :], wd_ref[...], preferred_element_type=f32)
          + b12_ref[...])                                                     # (nd, D)

    # i-major pair blow-up (broadcast add only), ReLU, one big layer-3 matmul
    h = jnp.maximum(hq[:, None, :] + hd[None, :, :], 0.0)               # (nq, nd, D)
    h2d = h.reshape(nqp * ndp, d).astype(jnp.bfloat16)                  # aligned merge
    h3 = jnp.maximum(jnp.dot(h2d, w3_ref[...], preferred_element_type=f32)
                     + b3_ref[...], 0.0)                                # (nq*nd, D/2)
    h3 = h3.reshape(nqp, ndp, dh)                                       # aligned split
    # final layer = lane reduce against w4; lands lane-dense in (nq, nd)
    pred = jnp.sum(h3 * w4_ref[...], axis=-1) + b4_ref[...]
    pred_ref[...] = jnp.maximum(pred, 0.0)


# ----------------------------------------------------------------------------
# One-time parameter folding (hoisted out of the per-call jitted path)
# ----------------------------------------------------------------------------
def prepare_params(params):
    qw1, qb1, qw2, qb2 = params["query_gin"]
    dw1, db1, dw2, db2 = params["data_gin"]
    gat_w, a_src, a_dst = params["gat"]
    w1, b1, w2, b2, w3, b3, w4, b4 = params["head"]
    d = qw2.shape[1]
    hq_dim, hd_dim = qw1.shape[1], dw1.shape[1]
    f32 = jnp.float32

    # head Linear1+Linear2 (no activation in between) folded into one weight,
    # split/stacked so each side of the pair needs a single K=2D matmul.
    w12 = w1 @ w2                                             # (4D, D)
    b12 = b1 @ w2 + b2                                        # (1, D)
    wq = w12[0 * d:2 * d]                                     # [qq; qa]  (2D, D)
    wd = w12[2 * d:4 * d]                                     # [dd; da]  (2D, D)

    return {
        # batched GIN weights
        "gin_w1": jnp.concatenate([qw1, dw1], axis=1).astype(f32),   # (F, Hq+Hd)
        "gin_b1": jnp.concatenate([qb1, db1], axis=1).astype(f32),   # (1, Hq+Hd)
        "gin_w2": jnp.concatenate([qw2, dw2], axis=0).astype(f32),   # (Hq+Hd, D)
        "gin_qb2": qb2.astype(f32), "gin_db2": db2.astype(f32),
        # per-node-type lane masks for the concatenated layer-1 output
        "gin_mask_q": jnp.concatenate(
            [jnp.ones((1, hq_dim), f32), jnp.zeros((1, hd_dim), f32)], axis=1),
        "gin_mask_d": jnp.concatenate(
            [jnp.zeros((1, hq_dim), f32), jnp.ones((1, hd_dim), f32)], axis=1),
        # GAT
        "gat_w": gat_w.astype(f32),
        "a_src": a_src.T.astype(f32), "a_dst": a_dst.T.astype(f32),  # (1, D) rows
        # folded pairwise head
        "wq": wq.astype(f32), "wd": wd.astype(f32), "b12": b12.astype(f32),
        "w3": w3.astype(jnp.bfloat16),   # bf16 operand for the (nq*nd, D) matmul
        "b3": b3.astype(f32),
        "w4": w4.T.astype(f32),          # (1, D/2) row for the lane reduce
        "b4": b4.astype(f32),
    }


# ----------------------------------------------------------------------------
# pallas_call wrapper (graph densification / padding is cheap per-call glue)
# ----------------------------------------------------------------------------
def _full_spec(shape):
    zeros = (0,) * len(shape)
    return pl.BlockSpec(shape, lambda i, _z=zeros: _z)


def _pad8(n):
    return ((n + 7) // 8) * 8


def attentive_count_net2_forward(prep, query_in_feat, data_in_feat,
                                 query_adj, data_adj, q2d_mask):
    f32 = jnp.float32
    nq, feat_dim = query_in_feat.shape
    nd = data_in_feat.shape[0]
    d = prep["gin_w2"].shape[1]
    nqp, ndp = _pad8(nq), _pad8(nd)
    n_pad = nqp + ndp

    # sublane-aligned padding; padded rows carry masked-out garbage only
    qf = jnp.zeros((nqp, feat_dim), f32).at[:nq].set(query_in_feat)
    df = jnp.zeros((ndp, feat_dim), f32).at[:nd].set(data_in_feat)
    all_feat = jnp.concatenate([qf, df], axis=0)

    # GIN eps=0 aggregation as a single block-diagonal (A + I) matmul
    blkadj = jnp.zeros((n_pad, n_pad), f32)
    blkadj = blkadj.at[:nq, :nq].set(query_adj + jnp.eye(nq, dtype=f32))
    blkadj = blkadj.at[nqp:nqp + nd, nqp:nqp + nd].set(
        data_adj + jnp.eye(nd, dtype=f32))

    # joint-graph attention mask remapped into the padded index space,
    # converted to additive form (0 keep / -1e30 drop)
    mask_p = jnp.zeros((n_pad, n_pad), f32)
    mask_p = mask_p.at[:nq, :nq].set(q2d_mask[:nq, :nq])
    mask_p = mask_p.at[:nq, nqp:nqp + nd].set(q2d_mask[:nq, nq:])
    mask_p = mask_p.at[nqp:nqp + nd, :nq].set(q2d_mask[nq:, :nq])
    mask_p = mask_p.at[nqp:nqp + nd, nqp:nqp + nd].set(q2d_mask[nq:, nq:])
    addmask = jnp.where(mask_p > 0.0, 0.0, -1e30).astype(f32)

    # per-node column mask for the batched GIN layer-1 output
    gin_mask = jnp.concatenate(
        [jnp.broadcast_to(prep["gin_mask_q"], (nqp, prep["gin_mask_q"].shape[1])),
         jnp.broadcast_to(prep["gin_mask_d"], (ndp, prep["gin_mask_d"].shape[1]))],
        axis=0)

    args = (blkadj, addmask, all_feat, gin_mask,
            prep["gin_w1"], prep["gin_b1"], prep["gin_w2"],
            prep["gin_qb2"], prep["gin_db2"],
            prep["gat_w"], prep["a_src"], prep["a_dst"],
            prep["wq"], prep["wd"], prep["b12"],
            prep["w3"], prep["b3"], prep["w4"], prep["b4"])

    out_shapes = (jax.ShapeDtypeStruct((nqp, ndp), f32),
                  jax.ShapeDtypeStruct((nqp, d), f32),
                  jax.ShapeDtypeStruct((ndp, d), f32))

    pred, qx, dx = pl.pallas_call(
        fused_kernel,
        out_shape=out_shapes,
        grid=(1,),
        in_specs=[_full_spec(a.shape) for a in args],
        out_specs=tuple(_full_spec(s.shape) for s in out_shapes),
        scratch_shapes=[pltpu.VMEM((n_pad, 2 * d), f32)],
        compiler_params=pltpu.CompilerParams(dimension_semantics=("arbitrary",)),
    )(*args)
    return pred[:nq, :nd], qx[:nq], dx[:nd]


# ----------------------------------------------------------------------------
# Pure-JAX reference (original, unfused math) for a sanity check
# ----------------------------------------------------------------------------
def _ref_gin(adj, x, w1, b1, w2, b2):
    h = x + adj @ x
    h = jnp.maximum(h @ w1 + b1, 0.0)
    h = h + adj @ h
    return jnp.maximum(h @ w2 + b2, 0.0)


def _ref_gat(mask, x, w, a_src, a_dst):
    z = x @ w
    e = (z @ a_src) + (z @ a_dst).T
    e = jnp.where(e > 0, e, 0.2 * e)
    e = jnp.where(mask > 0, e, -1e30)
    e = e - jnp.max(e, axis=-1, keepdims=True)
    p = jnp.exp(e) * mask
    alpha = p / jnp.sum(p, axis=-1, keepdims=True)
    return alpha @ z


def _ref_forward(params, q_feat, d_feat, q_adj, d_adj, q2d_mask):
    qx = _ref_gin(q_adj, q_feat, *params["query_gin"])
    dx = _ref_gin(d_adj, d_feat, *params["data_gin"])
    nq = q_feat.shape[0]
    gx = _ref_gat(q2d_mask, jnp.concatenate([q_feat, d_feat], 0), *params["gat"])
    oq = jnp.concatenate([qx, gx[:nq]], axis=1)
    od = jnp.concatenate([dx, gx[nq:]], axis=1)
    nd = od.shape[0]
    x = jnp.concatenate(
        [jnp.broadcast_to(oq[:, None, :], (nq, nd, oq.shape[1])),
         jnp.broadcast_to(od[None, :, :], (nq, nd, od.shape[1]))], axis=-1)
    w1, b1, w2, b2, w3, b3, w4, b4 = params["head"]
    h = x @ w1 + b1
    h = h @ w2 + b2
    h = jnp.maximum(h, 0.0)
    h = jnp.maximum(h @ w3 + b3, 0.0)
    h = jnp.maximum(h @ w4 + b4, 0.0)
    return h[..., 0], qx, dx


# ----------------------------------------------------------------------------
# Deterministic setup
# ----------------------------------------------------------------------------
def _init_params(key, in_dim, q_hidden, d_hidden, out_dim):
    ks = jax.random.split(key, 24)

    def w(k, shape, s=0.2):
        return jax.random.normal(k, shape, jnp.float32) * s

    return {
        "query_gin": (w(ks[0], (in_dim, q_hidden)), w(ks[1], (1, q_hidden), 0.1),
                      w(ks[2], (q_hidden, out_dim)), w(ks[3], (1, out_dim), 0.1)),
        "data_gin": (w(ks[4], (in_dim, d_hidden)), w(ks[5], (1, d_hidden), 0.1),
                     w(ks[6], (d_hidden, out_dim)), w(ks[7], (1, out_dim), 0.1)),
        "gat": (w(ks[8], (in_dim, out_dim)),
                w(ks[9], (out_dim, 1)), w(ks[10], (out_dim, 1))),
        "head": (w(ks[11], (4 * out_dim, 2 * out_dim)), w(ks[12], (1, 2 * out_dim), 0.1),
                 w(ks[13], (2 * out_dim, out_dim)), w(ks[14], (1, out_dim), 0.1),
                 w(ks[15], (out_dim, out_dim // 2)), w(ks[16], (1, out_dim // 2), 0.1),
                 w(ks[17], (out_dim // 2, 1)), w(ks[18], (1, 1), 0.1)),
    }


def _edges_to_adj(edges, n, add_self_loops=False):
    src, dst = edges[0], edges[1]
    adj = jnp.zeros((n, n), jnp.float32).at[dst, src].set(1.0)
    adj = jnp.maximum(adj, adj.T)  # undirected
    if add_self_loops:
        adj = jnp.maximum(adj, jnp.eye(n, dtype=jnp.float32))
    return adj


def _random_edges(key, n_src, n_dst, num_edges, dst_offset=0):
    k1, k2 = jax.random.split(key)
    src = jax.random.randint(k1, (num_edges,), 0, n_src)
    dst = jax.random.randint(k2, (num_edges,), 0, n_dst) + dst_offset
    return jnp.stack([src, dst]).astype(jnp.int32)


if __name__ == "__main__":
    IN_DIM, Q_HID, D_HID, OUT_DIM = 8, 16, 16, 32
    NQ, ND = 16, 24

    root = jax.random.PRNGKey(0)
    k_par, k_qf, k_df, k_qe, k_de, k_xe = jax.random.split(root, 6)

    params = _init_params(k_par, IN_DIM, Q_HID, D_HID, OUT_DIM)
    prep = prepare_params(params)            # one-time weight folding

    query_in_feat = jax.random.normal(k_qf, (NQ, IN_DIM), jnp.float32)
    data_in_feat = jax.random.normal(k_df, (ND, IN_DIM), jnp.float32)
    query_edge_list = _random_edges(k_qe, NQ, NQ, 32)
    data_edge_list = _random_edges(k_de, ND, ND, 48)
    query2data_edge_list = _random_edges(k_xe, NQ, ND, 40, dst_offset=NQ)

    # Dense graph structure (glue).
    query_adj = _edges_to_adj(query_edge_list, NQ)
    data_adj = _edges_to_adj(data_edge_list, ND)
    q2d_mask = _edges_to_adj(query2data_edge_list, NQ + ND, add_self_loops=True)

    fwd = jax.jit(attentive_count_net2_forward)
    pred, query_x_1, data_x_2 = fwd(prep, query_in_feat, data_in_feat,
                                    query_adj, data_adj, q2d_mask)
    jax.block_until_ready((pred, query_x_1, data_x_2))

    # Sanity check against a pure-JAX reference of the original (unfused) math.
    r_pred, r_qx, r_dx = _ref_forward(
        params, query_in_feat, data_in_feat, query_adj, data_adj, q2d_mask)
    assert pred.shape == (NQ, ND)
    assert query_x_1.shape == (NQ, OUT_DIM) and data_x_2.shape == (ND, OUT_DIM)
    assert jnp.allclose(pred, r_pred, rtol=5e-2, atol=3e-2)
    assert jnp.allclose(query_x_1, r_qx, rtol=5e-2, atol=3e-2)
    assert jnp.allclose(data_x_2, r_dx, rtol=5e-2, atol=3e-2)

    print("KERNEL_OK")
</pallas_src>

<mosaic_0001>
module attributes {stable_mosaic.version = 11 : i64} {
  func.func @fused_kernel(%arg0: i32, %arg1: memref<40x40xf32, #tpu.memory_space<vmem>>, %arg2: memref<40x40xf32, #tpu.memory_space<vmem>>, %arg3: memref<40x8xf32, #tpu.memory_space<vmem>>, %arg4: memref<40x32xf32, #tpu.memory_space<vmem>>, %arg5: memref<8x32xf32, #tpu.memory_space<vmem>>, %arg6: memref<1x32xf32, #tpu.memory_space<vmem>>, %arg7: memref<32x32xf32, #tpu.memory_space<vmem>>, %arg8: memref<1x32xf32, #tpu.memory_space<vmem>>, %arg9: memref<1x32xf32, #tpu.memory_space<vmem>>, %arg10: memref<8x32xf32, #tpu.memory_space<vmem>>, %arg11: memref<1x32xf32, #tpu.memory_space<vmem>>, %arg12: memref<1x32xf32, #tpu.memory_space<vmem>>, %arg13: memref<64x32xf32, #tpu.memory_space<vmem>>, %arg14: memref<64x32xf32, #tpu.memory_space<vmem>>, %arg15: memref<1x32xf32, #tpu.memory_space<vmem>>, %arg16: memref<32x16xbf16, #tpu.memory_space<vmem>>, %arg17: memref<1x16xf32, #tpu.memory_space<vmem>>, %arg18: memref<1x16xf32, #tpu.memory_space<vmem>>, %arg19: memref<1x1xf32, #tpu.memory_space<vmem>>, %arg20: memref<16x24xf32, #tpu.memory_space<vmem>>, %arg21: memref<16x32xf32, #tpu.memory_space<vmem>>, %arg22: memref<24x32xf32, #tpu.memory_space<vmem>>, %arg23: memref<40x64xf32, #tpu.memory_space<vmem>>) attributes {dimension_semantics = [#tpu.dimension_semantics<arbitrary>], iteration_bounds = array<i64: 1>, scalar_prefetch = 0 : i64, scratch_operands = 1 : i64, tpu.core_type = #tpu.core_type<tc>, window_params = [{pipeline_mode = #tpu.pipeline_mode<synchronous>, transform_indices = @transform_0, window_bounds = array<i64: 40, 40>}, {pipeline_mode = #tpu.pipeline_mode<synchronous>, transform_indices = @transform_1, window_bounds = array<i64: 40, 40>}, {pipeline_mode = #tpu.pipeline_mode<synchronous>, transform_indices = @transform_2, window_bounds = array<i64: 40, 8>}, {pipeline_mode = #tpu.pipeline_mode<synchronous>, transform_indices = @transform_3, window_bounds = array<i64: 40, 32>}, {pipeline_mode = #tpu.pipeline_mode<synchronous>, transform_indices = @transform_4, window_bounds = array<i64: 8, 32>}, {pipeline_mode = #tpu.pipeline_mode<synchronous>, transform_indices = @transform_5, window_bounds = array<i64: 1, 32>}, {pipeline_mode = #tpu.pipeline_mode<synchronous>, transform_indices = @transform_6, window_bounds = array<i64: 32, 32>}, {pipeline_mode = #tpu.pipeline_mode<synchronous>, transform_indices = @transform_7, window_bounds = array<i64: 1, 32>}, {pipeline_mode = #tpu.pipeline_mode<synchronous>, transform_indices = @transform_8, window_bounds = array<i64: 1, 32>}, {pipeline_mode = #tpu.pipeline_mode<synchronous>, transform_indices = @transform_9, window_bounds = array<i64: 8, 32>}, {pipeline_mode = #tpu.pipeline_mode<synchronous>, transform_indices = @transform_10, window_bounds = array<i64: 1, 32>}, {pipeline_mode = #tpu.pipeline_mode<synchronous>, transform_indices = @transform_11, window_bounds = array<i64: 1, 32>}, {pipeline_mode = #tpu.pipeline_mode<synchronous>, transform_indices = @transform_12, window_bounds = array<i64: 64, 32>}, {pipeline_mode = #tpu.pipeline_mode<synchronous>, transform_indices = @transform_13, window_bounds = array<i64: 64, 32>}, {pipeline_mode = #tpu.pipeline_mode<synchronous>, transform_indices = @transform_14, window_bounds = array<i64: 1, 32>}, {pipeline_mode = #tpu.pipeline_mode<synchronous>, transform_indices = @transform_15, window_bounds = array<i64: 32, 16>}, {pipeline_mode = #tpu.pipeline_mode<synchronous>, transform_indices = @transform_16, window_bounds = array<i64: 1, 16>}, {pipeline_mode = #tpu.pipeline_mode<synchronous>, transform_indices = @transform_17, window_bounds = array<i64: 1, 16>}, {pipeline_mode = #tpu.pipeline_mode<synchronous>, transform_indices = @transform_18, window_bounds = array<i64: 1, 1>}, {pipeline_mode = #tpu.pipeline_mode<synchronous>, transform_indices = @transform_19, window_bounds = array<i64: 16, 24>}, {pipeline_mode = #tpu.pipeline_mode<synchronous>, transform_indices = @transform_20, window_bounds = array<i64: 16, 32>}, {pipeline_mode = #tpu.pipeline_mode<synchronous>, transform_indices = @transform_21, window_bounds = array<i64: 24, 32>}]} {
    %c0 = arith.constant 0 : index
    %c0_0 = arith.constant 0 : index
    %0 = vector.load %arg3[%c0, %c0_0] : memref<40x8xf32, #tpu.memory_space<vmem>>, vector<40x8xf32>
    %c0_1 = arith.constant 0 : index
    %c0_2 = arith.constant 0 : index
    %1 = vector.load %arg1[%c0_1, %c0_2] : memref<40x40xf32, #tpu.memory_space<vmem>>, vector<40x40xf32>
    %cst = arith.constant dense<0.000000e+00> : vector<40x8xf32>
    %2 = tpu.matmul %1, %0, %cst {dimension_numbers = #tpu.dot_dimension_numbers<[1], [0], [0], [1], [0, 0, 1, 1], [], []>} : vector<40x40xf32>, vector<40x8xf32>, vector<40x8xf32> -> vector<40x8xf32>
    %c0_3 = arith.constant 0 : index
    %c0_4 = arith.constant 0 : index
    %3 = vector.load %arg5[%c0_3, %c0_4] : memref<8x32xf32, #tpu.memory_space<vmem>>, vector<8x32xf32>
    %cst_5 = arith.constant dense<0.000000e+00> : vector<40x32xf32>
    %4 = tpu.matmul %2, %3, %cst_5 {dimension_numbers = #tpu.dot_dimension_numbers<[1], [0], [0], [1], [0, 0, 1, 1], [], []>} : vector<40x8xf32>, vector<8x32xf32>, vector<40x32xf32> -> vector<40x32xf32>
    %c0_6 = arith.constant 0 : index
    %c0_7 = arith.constant 0 : index
    %5 = vector.load %arg6[%c0_6, %c0_7] : memref<1x32xf32, #tpu.memory_space<vmem>>, vector<1x32xf32>
    %6 = vector.broadcast %5 : vector<1x32xf32> to vector<40x32xf32>
    %7 = arith.addf %4, %6 : vector<40x32xf32>
    %cst_8 = arith.constant 0.000000e+00 : f32
    %8 = vector.broadcast %cst_8 : f32 to vector<40x32xf32>
    %9 = arith.maximumf %7, %8 : vector<40x32xf32>
    %c0_9 = arith.constant 0 : index
    %c0_10 = arith.constant 0 : index
    %10 = vector.load %arg4[%c0_9, %c0_10] : memref<40x32xf32, #tpu.memory_space<vmem>>, vector<40x32xf32>
    %11 = arith.mulf %9, %10 : vector<40x32xf32>
    %cst_11 = arith.constant dense<0.000000e+00> : vector<40x32xf32>
    %12 = tpu.matmul %1, %11, %cst_11 {dimension_numbers = #tpu.dot_dimension_numbers<[1], [0], [0], [1], [0, 0, 1, 1], [], []>} : vector<40x40xf32>, vector<40x32xf32>, vector<40x32xf32> -> vector<40x32xf32>
    %c0_12 = arith.constant 0 : index
    %c0_13 = arith.constant 0 : index
    %13 = vector.load %arg7[%c0_12, %c0_13] : memref<32x32xf32, #tpu.memory_space<vmem>>, vector<32x32xf32>
    %cst_14 = arith.constant dense<0.000000e+00> : vector<40x32xf32>
    %14 = tpu.matmul %12, %13, %cst_14 {dimension_numbers = #tpu.dot_dimension_numbers<[1], [0], [0], [1], [0, 0, 1, 1], [], []>} : vector<40x32xf32>, vector<32x32xf32>, vector<40x32xf32> -> vector<40x32xf32>
    %15 = vector.extract_strided_slice %14 {offsets = [0, 0], sizes = [16, 32], strides = [1, 1]} : vector<40x32xf32> to vector<16x32xf32>
    %c0_15 = arith.constant 0 : index
    %c0_16 = arith.constant 0 : index
    %16 = vector.load %arg8[%c0_15, %c0_16] : memref<1x32xf32, #tpu.memory_space<vmem>>, vector<1x32xf32>
    %17 = vector.broadcast %16 : vector<1x32xf32> to vector<16x32xf32>
    %18 = arith.addf %15, %17 : vector<16x32xf32>
    %cst_17 = arith.constant 0.000000e+00 : f32
    %19 = vector.broadcast %cst_17 : f32 to vector<16x32xf32>
    %20 = arith.maximumf %18, %19 : vector<16x32xf32>
    %21 = vector.extract_strided_slice %14 {offsets = [16, 0], sizes = [24, 32], strides = [1, 1]} : vector<40x32xf32> to vector<24x32xf32>
    %c0_18 = arith.constant 0 : index
    %c0_19 = arith.constant 0 : index
    %22 = vector.load %arg9[%c0_18, %c0_19] : memref<1x32xf32, #tpu.memory_space<vmem>>, vector<1x32xf32>
    %23 = vector.broadcast %22 : vector<1x32xf32> to vector<24x32xf32>
    %24 = arith.addf %21, %23 : vector<24x32xf32>
    %cst_20 = arith.constant 0.000000e+00 : f32
    %25 = vector.broadcast %cst_20 : f32 to vector<24x32xf32>
    %26 = arith.maximumf %24, %25 : vector<24x32xf32>
    %c0_21 = arith.constant 0 : index
    %c0_22 = arith.constant 0 : index
    %27 = vector.load %arg21[%c0_21, %c0_22] : memref<16x32xf32, #tpu.memory_space<vmem>>, vector<16x32xf32>
    tpu.vector_store %arg21[%c0_21, %c0_22], %20 {strides = array<i32>} : memref<16x32xf32, #tpu.memory_space<vmem>>, vector<16x32xf32>,
    %c0_23 = arith.constant 0 : index
    %c0_24 = arith.constant 0 : index
    %28 = vector.load %arg22[%c0_23, %c0_24] : memref<24x32xf32, #tpu.memory_space<vmem>>, vector<24x32xf32>
    tpu.vector_store %arg22[%c0_23, %c0_24], %26 {strides = array<i32>} : memref<24x32xf32, #tpu.memory_space<vmem>>, vector<24x32xf32>,
    %c0_25 = arith.constant 0 : index
    %c0_26 = arith.constant 0 : index
    %29 = vector.load %arg10[%c0_25, %c0_26] : memref<8x32xf32, #tpu.memory_space<vmem>>, vector<8x32xf32>
    %cst_27 = arith.constant dense<0.000000e+00> : vector<40x32xf32>
    %30 = tpu.matmul %0, %29, %cst_27 {dimension_numbers = #tpu.dot_dimension_numbers<[1], [0], [0], [1], [0, 0, 1, 1], [], []>} : vector<40x8xf32>, vector<8x32xf32>, vector<40x32xf32> -> vector<40x32xf32>
    %c0_28 = arith.constant 0 : index
    %c0_29 = arith.constant 0 : index
    %31 = vector.load %arg11[%c0_28, %c0_29] : memref<1x32xf32, #tpu.memory_space<vmem>>, vector<1x32xf32>
    %32 = vector.broadcast %31 : vector<1x32xf32> to vector<40x32xf32>
    %33 = arith.mulf %30, %32 : vector<40x32xf32>
    %cst_30 = arith.constant dense<0.000000e+00> : vector<40xf32>
    %34 = vector.multi_reduction <add>, %33, %cst_30 [1] : vector<40x32xf32> to vector<40xf32>
    %35 = vector.shape_cast %34 : vector<40xf32> to vector<40x1xf32>
    %c0_31 = arith.constant 0 : index
    %c0_32 = arith.constant 0 : index
    %36 = vector.load %arg12[%c0_31, %c0_32] : memref<1x32xf32, #tpu.memory_space<vmem>>, vector<1x32xf32>
    %37 = vector.broadcast %36 : vector<1x32xf32> to vector<40x32xf32>
    %38 = arith.mulf %30, %37 : vector<40x32xf32>
    %cst_33 = arith.constant dense<0.000000e+00> : vector<40xf32>
    %39 = vector.multi_reduction <add>, %38, %cst_33 [1] : vector<40x32xf32> to vector<40xf32>
    %40 = vector.shape_cast %39 : vector<40xf32> to vector<40x1xf32>
    %41 = tpu.transpose %40, [1, 0] : vector<40x1xf32> -> vector<1x40xf32>
    %42 = vector.broadcast %35 : vector<40x1xf32> to vector<40x40xf32>
    %43 = vector.broadcast %41 : vector<1x40xf32> to vector<40x40xf32>
    %44 = arith.addf %42, %43 : vector<40x40xf32>
    %cst_34 = arith.constant 0.000000e+00 : f32
    %45 = vector.broadcast %cst_34 : f32 to vector<40x40xf32>
    %46 = arith.cmpf ogt, %44, %45 : vector<40x40xf32>
    %cst_35 = arith.constant 2.000000e-01 : f32
    %47 = vector.broadcast %cst_35 : f32 to vector<40x40xf32>
    %48 = arith.mulf %47, %44 : vector<40x40xf32>
    %49 = arith.select %46, %44, %48 : vector<40x40xi1>, vector<40x40xf32>
    %c0_36 = arith.constant 0 : index
    %c0_37 = arith.constant 0 : index
    %50 = vector.load %arg2[%c0_36, %c0_37] : memref<40x40xf32, #tpu.memory_space<vmem>>, vector<40x40xf32>
    %51 = arith.addf %49, %50 : vector<40x40xf32>
    %cst_38 = arith.constant dense<0xFF800000> : vector<40xf32>
    %52 = vector.multi_reduction <maximumf>, %51, %cst_38 [1] : vector<40x40xf32> to vector<40xf32>
    %53 = vector.shape_cast %52 : vector<40xf32> to vector<40x1xf32>
    %54 = vector.broadcast %53 : vector<40x1xf32> to vector<40x40xf32>
    %55 = arith.subf %51, %54 : vector<40x40xf32>
    %56 = math.exp %55 : vector<40x40xf32>
    %cst_39 = arith.constant dense<0.000000e+00> : vector<40xf32>
    %57 = vector.multi_reduction <add>, %56, %cst_39 [1] : vector<40x40xf32> to vector<40xf32>
    %58 = vector.shape_cast %57 : vector<40xf32> to vector<40x1xf32>
    %cst_40 = arith.constant 1.000000e-30 : f32
    %59 = vector.broadcast %cst_40 : f32 to vector<40x1xf32>
    %60 = arith.maximumf %58, %59 : vector<40x1xf32>
    %61 = tpu.reciprocal %60 {approx = true} : vector<40x1xf32> -> vector<40x1xf32>
    %62 = vector.broadcast %61 : vector<40x1xf32> to vector<40x40xf32>
    %63 = arith.mulf %56, %62 : vector<40x40xf32>
    %cst_41 = arith.constant dense<0.000000e+00> : vector<40x32xf32>
    %64 = tpu.matmul %63, %30, %cst_41 {dimension_numbers = #tpu.dot_dimension_numbers<[1], [0], [0], [1], [0, 0, 1, 1], [], []>} : vector<40x40xf32>, vector<40x32xf32>, vector<40x32xf32> -> vector<40x32xf32>
    %c0_42 = arith.constant 0 : index
    %c0_43 = arith.constant 0 : index
    %65 = vector.load %arg23[%c0_42, %c0_43] : memref<40x64xf32, #tpu.memory_space<vmem>>, vector<16x32xf32>
    tpu.vector_store %arg23[%c0_42, %c0_43], %20 {strides = array<i32>} : memref<40x64xf32, #tpu.memory_space<vmem>>, vector<16x32xf32>,
    %c16 = arith.constant 16 : index
    %c0_44 = arith.constant 0 : index
    %66 = vector.load %arg23[%c16, %c0_44] : memref<40x64xf32, #tpu.memory_space<vmem>>, vector<24x32xf32>
    tpu.vector_store %arg23[%c16, %c0_44], %26 {strides = array<i32>} : memref<40x64xf32, #tpu.memory_space<vmem>>, vector<24x32xf32>,
    %c0_45 = arith.constant 0 : index
    %c32 = arith.constant 32 : index
    %67 = vector.load %arg23[%c0_45, %c32] : memref<40x64xf32, #tpu.memory_space<vmem>>, vector<40x32xf32>
    tpu.vector_store %arg23[%c0_45, %c32], %64 {strides = array<i32>} : memref<40x64xf32, #tpu.memory_space<vmem>>, vector<40x32xf32>,
    %c0_46 = arith.constant 0 : index
    %c0_47 = arith.constant 0 : index
    %68 = vector.load %arg23[%c0_46, %c0_47] : memref<40x64xf32, #tpu.memory_space<vmem>>, vector<16x64xf32>
    %c0_48 = arith.constant 0 : index
    %c0_49 = arith.constant 0 : index
    %69 = vector.load %arg13[%c0_48, %c0_49] : memref<64x32xf32, #tpu.memory_space<vmem>>, vector<64x32xf32>
    %cst_50 = arith.constant dense<0.000000e+00> : vector<16x32xf32>
    %70 = tpu.matmul %68, %69, %cst_50 {dimension_numbers = #tpu.dot_dimension_numbers<[1], [0], [0], [1], [0, 0, 1, 1], [], []>} : vector<16x64xf32>, vector<64x32xf32>, vector<16x32xf32> -> vector<16x32xf32>
    %c16_51 = arith.constant 16 : index
    %c0_52 = arith.constant 0 : index
    %71 = vector.load %arg23[%c16_51, %c0_52] : memref<40x64xf32, #tpu.memory_space<vmem>>, vector<24x64xf32>
    %c0_53 = arith.constant 0 : index
    %c0_54 = arith.constant 0 : index
    %72 = vector.load %arg14[%c0_53, %c0_54] : memref<64x32xf32, #tpu.memory_space<vmem>>, vector<64x32xf32>
    %cst_55 = arith.constant dense<0.000000e+00> : vector<24x32xf32>
    %73 = tpu.matmul %71, %72, %cst_55 {dimension_numbers = #tpu.dot_dimension_numbers<[1], [0], [0], [1], [0, 0, 1, 1], [], []>} : vector<24x64xf32>, vector<64x32xf32>, vector<24x32xf32> -> vector<24x32xf32>
    %c0_56 = arith.constant 0 : index
    %c0_57 = arith.constant 0 : index
    %74 = vector.load %arg15[%c0_56, %c0_57] : memref<1x32xf32, #tpu.memory_space<vmem>>, vector<1x32xf32>
    %75 = vector.broadcast %74 : vector<1x32xf32> to vector<24x32xf32>
    %76 = arith.addf %73, %75 : vector<24x32xf32>
    %77 = vector.shape_cast %70 : vector<16x32xf32> to vector<16x1x32xf32>
    %78 = vector.shape_cast %76 : vector<24x32xf32> to vector<1x24x32xf32>
    %79 = vector.broadcast %77 : vector<16x1x32xf32> to vector<16x24x32xf32>
    %80 = vector.broadcast %78 : vector<1x24x32xf32> to vector<16x24x32xf32>
    %81 = arith.addf %79, %80 : vector<16x24x32xf32>
    %cst_58 = arith.constant 0.000000e+00 : f32
    %82 = vector.broadcast %cst_58 : f32 to vector<16x24x32xf32>
    %83 = arith.maximumf %81, %82 : vector<16x24x32xf32>
    %84 = vector.shape_cast %83 : vector<16x24x32xf32> to vector<384x32xf32>
    %85 = arith.truncf %84 : vector<384x32xf32> to vector<384x32xbf16>
    %c0_59 = arith.constant 0 : index
    %c0_60 = arith.constant 0 : index
    %86 = vector.load %arg16[%c0_59, %c0_60] : memref<32x16xbf16, #tpu.memory_space<vmem>>, vector<32x16xbf16>
    %cst_61 = arith.constant dense<0.000000e+00> : vector<384x16xf32>
    %87 = tpu.matmul %85, %86, %cst_61 {dimension_numbers = #tpu.dot_dimension_numbers<[1], [0], [0], [1], [0, 0, 1, 1], [], []>} : vector<384x32xbf16>, vector<32x16xbf16>, vector<384x16xf32> -> vector<384x16xf32>
    %c0_62 = arith.constant 0 : index
    %c0_63 = arith.constant 0 : index
    %88 = vector.load %arg17[%c0_62, %c0_63] : memref<1x16xf32, #tpu.memory_space<vmem>>, vector<1x16xf32>
    %89 = vector.broadcast %88 : vector<1x16xf32> to vector<384x16xf32>
    %90 = arith.addf %87, %89 : vector<384x16xf32>
    %cst_64 = arith.constant 0.000000e+00 : f32
    %91 = vector.broadcast %cst_64 : f32 to vector<384x16xf32>
    %92 = arith.maximumf %90, %91 : vector<384x16xf32>
    %93 = vector.shape_cast %92 : vector<384x16xf32> to vector<16x24x16xf32>
    %c0_65 = arith.constant 0 : index
    %c0_66 = arith.constant 0 : index
    %94 = vector.load %arg18[%c0_65, %c0_66] : memref<1x16xf32, #tpu.memory_space<vmem>>, vector<1x16xf32>
    %95 = vector.shape_cast %94 : vector<1x16xf32> to vector<1x1x16xf32>
    %96 = vector.broadcast %95 : vector<1x1x16xf32> to vector<16x24x16xf32>
    %97 = arith.mulf %93, %96 : vector<16x24x16xf32>
    %cst_67 = arith.constant dense<0.000000e+00> : vector<16x24xf32>
    %98 = vector.multi_reduction <add>, %97, %cst_67 [2] : vector<16x24x16xf32> to vector<16x24xf32>
    %c0_68 = arith.constant 0 : index
    %c0_69 = arith.constant 0 : index
    %99 = vector.load %arg19[%c0_68, %c0_69] : memref<1x1xf32, #tpu.memory_space<vmem>>, vector<1x1xf32>
    %100 = vector.broadcast %99 : vector<1x1xf32> to vector<16x24xf32>
    %101 = arith.addf %98, %100 : vector<16x24xf32>
    %cst_70 = arith.constant 0.000000e+00 : f32
    %102 = vector.broadcast %cst_70 : f32 to vector<16x24xf32>
    %103 = arith.maximumf %101, %102 : vector<16x24xf32>
    %c0_71 = arith.constant 0 : index
    %c0_72 = arith.constant 0 : index
    %104 = vector.load %arg20[%c0_71, %c0_72] : memref<16x24xf32, #tpu.memory_space<vmem>>, vector<16x24xf32>
    tpu.vector_store %arg20[%c0_71, %c0_72], %103 {strides = array<i32>} : memref<16x24xf32, #tpu.memory_space<vmem>>, vector<16x24xf32>,
    return
  }
  func.func @transform_0(%arg0: i32) -> (i32, i32) {
    %c0_i32 = arith.constant 0 : i32
    %c0_i32_0 = arith.constant 0 : i32
    %c0_i32_1 = arith.constant 0 : i32
    return %c0_i32, %c0_i32_0 : i32, i32
  }
  func.func @transform_1(%arg0: i32) -> (i32, i32) {
    %c0_i32 = arith.constant 0 : i32
    %c0_i32_0 = arith.constant 0 : i32
    %c0_i32_1 = arith.constant 0 : i32
    return %c0_i32, %c0_i32_0 : i32, i32
  }
  func.func @transform_2(%arg0: i32) -> (i32, i32) {
    %c0_i32 = arith.constant 0 : i32
    %c0_i32_0 = arith.constant 0 : i32
    %c0_i32_1 = arith.constant 0 : i32
    return %c0_i32, %c0_i32_0 : i32, i32
  }
  func.func @transform_3(%arg0: i32) -> (i32, i32) {
    %c0_i32 = arith.constant 0 : i32
    %c0_i32_0 = arith.constant 0 : i32
    %c0_i32_1 = arith.constant 0 : i32
    return %c0_i32, %c0_i32_0 : i32, i32
  }
  func.func @transform_4(%arg0: i32) -> (i32, i32) {
    %c0_i32 = arith.constant 0 : i32
    %c0_i32_0 = arith.constant 0 : i32
    %c0_i32_1 = arith.constant 0 : i32
    return %c0_i32, %c0_i32_0 : i32, i32
  }
  func.func @transform_5(%arg0: i32) -> (i32, i32) {
    %c0_i32 = arith.constant 0 : i32
    %c0_i32_0 = arith.constant 0 : i32
    %c0_i32_1 = arith.constant 0 : i32
    return %c0_i32, %c0_i32_0 : i32, i32
  }
  func.func @transform_6(%arg0: i32) -> (i32, i32) {
    %c0_i32 = arith.constant 0 : i32
    %c0_i32_0 = arith.constant 0 : i32
    %c0_i32_1 = arith.constant 0 : i32
    return %c0_i32, %c0_i32_0 : i32, i32
  }
  func.func @transform_7(%arg0: i32) -> (i32, i32) {
    %c0_i32 = arith.constant 0 : i32
    %c0_i32_0 = arith.constant 0 : i32
    %c0_i32_1 = arith.constant 0 : i32
    return %c0_i32, %c0_i32_0 : i32, i32
  }
  func.func @transform_8(%arg0: i32) -> (i32, i32) {
    %c0_i32 = arith.constant 0 : i32
    %c0_i32_0 = arith.constant 0 : i32
    %c0_i32_1 = arith.constant 0 : i32
    return %c0_i32, %c0_i32_0 : i32, i32
  }
  func.func @transform_9(%arg0: i32) -> (i32, i32) {
    %c0_i32 = arith.constant 0 : i32
    %c0_i32_0 = arith.constant 0 : i32
    %c0_i32_1 = arith.constant 0 : i32
    return %c0_i32, %c0_i32_0 : i32, i32
  }
  func.func @transform_10(%arg0: i32) -> (i32, i32) {
    %c0_i32 = arith.constant 0 : i32
    %c0_i32_0 = arith.constant 0 : i32
    %c0_i32_1 = arith.constant 0 : i32
    return %c0_i32, %c0_i32_0 : i32, i32
  }
  func.func @transform_11(%arg0: i32) -> (i32, i32) {
    %c0_i32 = arith.constant 0 : i32
    %c0_i32_0 = arith.constant 0 : i32
    %c0_i32_1 = arith.constant 0 : i32
    return %c0_i32, %c0_i32_0 : i32, i32
  }
  func.func @transform_12(%arg0: i32) -> (i32, i32) {
    %c0_i32 = arith.constant 0 : i32
    %c0_i32_0 = arith.constant 0 : i32
    %c0_i32_1 = arith.constant 0 : i32
    return %c0_i32, %c0_i32_0 : i32, i32
  }
  func.func @transform_13(%arg0: i32) -> (i32, i32) {
    %c0_i32 = arith.constant 0 : i32
    %c0_i32_0 = arith.constant 0 : i32
    %c0_i32_1 = arith.constant 0 : i32
    return %c0_i32, %c0_i32_0 : i32, i32
  }
  func.func @transform_14(%arg0: i32) -> (i32, i32) {
    %c0_i32 = arith.constant 0 : i32
    %c0_i32_0 = arith.constant 0 : i32
    %c0_i32_1 = arith.constant 0 : i32
    return %c0_i32, %c0_i32_0 : i32, i32
  }
  func.func @transform_15(%arg0: i32) -> (i32, i32) {
    %c0_i32 = arith.constant 0 : i32
    %c0_i32_0 = arith.constant 0 : i32
    %c0_i32_1 = arith.constant 0 : i32
    return %c0_i32, %c0_i32_0 : i32, i32
  }
  func.func @transform_16(%arg0: i32) -> (i32, i32) {
    %c0_i32 = arith.constant 0 : i32
    %c0_i32_0 = arith.constant 0 : i32
    %c0_i32_1 = arith.constant 0 : i32
    return %c0_i32, %c0_i32_0 : i32, i32
  }
  func.func @transform_17(%arg0: i32) -> (i32, i32) {
    %c0_i32 = arith.constant 0 : i32
    %c0_i32_0 = arith.constant 0 : i32
    %c0_i32_1 = arith.constant 0 : i32
    return %c0_i32, %c0_i32_0 : i32, i32
  }
  func.func @transform_18(%arg0: i32) -> (i32, i32) {
    %c0_i32 = arith.constant 0 : i32
    %c0_i32_0 = arith.constant 0 : i32
    %c0_i32_1 = arith.constant 0 : i32
    return %c0_i32, %c0_i32_0 : i32, i32
  }
  func.func @transform_19(%arg0: i32) -> (i32, i32) {
    %c0_i32 = arith.constant 0 : i32
    %c0_i32_0 = arith.constant 0 : i32
    %c0_i32_1 = arith.constant 0 : i32
    return %c0_i32, %c0_i32_0 : i32, i32
  }
  func.func @transform_20(%arg0: i32) -> (i32, i32) {
    %c0_i32 = arith.constant 0 : i32
    %c0_i32_0 = arith.constant 0 : i32
    %c0_i32_1 = arith.constant 0 : i32
    return %c0_i32, %c0_i32_0 : i32, i32
  }
  func.func @transform_21(%arg0: i32) -> (i32, i32) {
    %c0_i32 = arith.constant 0 : i32
    %c0_i32_0 = arith.constant 0 : i32
    %c0_i32_1 = arith.constant 0 : i32
    return %c0_i32, %c0_i32_0 : i32, i32
  }
}

</mosaic_0001>

<llo_original>
// kernel: attentive_count_net2_forward.1
$region0: #{attentive_count_net2_forward.1}
  #allocation0 [shape = 'u32[]', space=smem, size = 0x4, offset = 0x4, fixed_abs, tag = 'smem constant byte address 0x4 - core index']
  #allocation1 [shape = 'u32[144,128]{1,0:T(1,128)}', space=vmem, size = 0x12000, scoped, tag = 'internal scratch']
  #allocation2 [shape = 'f32[40,64]{1,0:T(8,128)}', space=vmem, size = 0x5000, scoped, tag = 'scratch operand']
  #allocation3 [shape = 'f32[1,1]{1,0:T(1,128)S(1)}', space=vmem, size = 0x200, scoped, tag = 'scoped memory for attentive_count_net2_forward.1']
  %s0 = inlined_call_operand.vmem [shape: f32[40,40], index: 0, kind: input, shape index: {}]
  %s1 = inlined_call_operand.vmem [shape: f32[40,40], index: 1, kind: input, shape index: {}]
  %s2 = inlined_call_operand.vmem [shape: f32[40,8], index: 2, kind: input, shape index: {}]
  %s3 = inlined_call_operand.vmem [shape: f32[40,32], index: 3, kind: input, shape index: {}]
  %s4 = inlined_call_operand.vmem [shape: f32[8,32], index: 4, kind: input, shape index: {}]
  %s5 = inlined_call_operand.vmem [shape: f32[1,32], index: 5, kind: input, shape index: {}]
  %s6 = inlined_call_operand.vmem [shape: f32[32,32], index: 6, kind: input, shape index: {}]
  %s7 = inlined_call_operand.vmem [shape: f32[1,32], index: 7, kind: input, shape index: {}]
  %s8 = inlined_call_operand.vmem [shape: f32[1,32], index: 8, kind: input, shape index: {}]
  %s9 = inlined_call_operand.vmem [shape: f32[8,32], index: 9, kind: input, shape index: {}]
  %s10 = inlined_call_operand.vmem [shape: f32[1,32], index: 10, kind: input, shape index: {}]
  %s11 = inlined_call_operand.vmem [shape: f32[1,32], index: 11, kind: input, shape index: {}]
  %s12 = inlined_call_operand.vmem [shape: f32[64,32], index: 12, kind: input, shape index: {}]
  %s13 = inlined_call_operand.vmem [shape: f32[64,32], index: 13, kind: input, shape index: {}]
  %s14 = inlined_call_operand.vmem [shape: f32[1,32], index: 14, kind: input, shape index: {}]
  %s15 = inlined_call_operand.vmem [shape: bf16[32,16], index: 15, kind: input, shape index: {}]
  %s16 = inlined_call_operand.vmem [shape: f32[1,16], index: 16, kind: input, shape index: {}]
  %s17 = inlined_call_operand.vmem [shape: f32[1,16], index: 17, kind: input, shape index: {}]
  %s18 = inlined_call_operand.<no memory space> [shape: f32[1,1], index: 18, kind: input, shape index: {}]
  %s19 = inlined_call_operand.hbm [shape: f32[16,24], index: 19, kind: output, shape index: {0}]
  %s20 = inlined_call_operand.hbm [shape: f32[16,32], index: 20, kind: output, shape index: {1}]
  %s21 = inlined_call_operand.hbm [shape: f32[24,32], index: 21, kind: output, shape index: {2}]
  %22 = xla_tuple %s19, %s20, %s21
  %s23 = sld [smem:[#allocation0]]
  $region102: #{attentive_count_net2_forward.1} parent=0
    _
  %s25 = ssub.s32 1, %s23
  %s26 = scalar_select 0, %s25, %s23
  %v27 = vstv %s18
  %28 = vst [vmem:[#allocation3] sm:$0x1] %v27
  $region1: #{attentive_count_net2_forward.1} parent=0
    #allocation4 [shape = 'u8[8192]{0}', space=vmem, size = 0x2000, scoped, tag = 'output window, operand 0, single buffered']
    #allocation5 [shape = 's32[1]{0}', space=sflag, size = 0x4, scoped, tag = 'scoped memory for attentive_count_net2_forward.1']
    #allocation6 [shape = 'u8[8192]{0}', space=vmem, size = 0x2000, scoped, tag = 'output window, operand 1, single buffered']
    #allocation7 [shape = 's32[1]{0}', space=sflag, size = 0x4, scoped, tag = 'scoped memory for attentive_count_net2_forward.1']
    #allocation8 [shape = 'u8[12288]{0}', space=vmem, size = 0x3000, scoped, tag = 'output window, operand 2, single buffered']
    %29 = vsyncpa [#allocation5], 0
    %30 = vsyncpa [#allocation7], 0
    // Predicated region
    $region2: #{attentive_count_net2_forward.1} parent=1 // pred_check
      _
    $region3: #{attentive_count_net2_forward.1} parent=1 // pred_check_branch
      %32 = sbr.rel (0) target = $region5
    $region4: #{attentive_count_net2_forward.1} parent=1 // pred_region
      _
    $region5: #{attentive_count_net2_forward.1} parent=1 // pred_fallthru
      _
    // Predicated region
    $region6: #{attentive_count_net2_forward.1} parent=1 // pred_check
      _
    $region7: #{attentive_count_net2_forward.1} parent=1 // pred_check_branch
      %34 = sbr.rel (0) target = $region9
    $region8: #{attentive_count_net2_forward.1} parent=1 // pred_region
      _
    $region9: #{attentive_count_net2_forward.1} parent=1 // pred_fallthru
      _
    // Predicated region
    $region10: #{attentive_count_net2_forward.1} parent=1 // pred_check
      _
    $region11: #{attentive_count_net2_forward.1} parent=1 // pred_check_branch
      %36 = sbr.rel (0) target = $region13
    $region12: #{attentive_count_net2_forward.1} parent=1 // pred_region
      _
    $region13: #{attentive_count_net2_forward.1} parent=1 // pred_fallthru
      _
    // Predicated region
    $region14: #{attentive_count_net2_forward.1} parent=1 // pred_check
      _
    $region15: #{attentive_count_net2_forward.1} parent=1 // pred_check_branch
      %38 = sbr.rel (0) target = $region17
    $region16: #{attentive_count_net2_forward.1} parent=1 // pred_region
      _
    $region17: #{attentive_count_net2_forward.1} parent=1 // pred_fallthru
      _
    // Predicated region
    $region18: #{attentive_count_net2_forward.1} parent=1 // pred_check
      _
    $region19: #{attentive_count_net2_forward.1} parent=1 // pred_check_branch
      %40 = sbr.rel (0) target = $region21
    $region20: #{attentive_count_net2_forward.1} parent=1 // pred_region
      _
    $region21: #{attentive_count_net2_forward.1} parent=1 // pred_fallthru
      _
    // Predicated region
    $region22: #{attentive_count_net2_forward.1} parent=1 // pred_check
      _
    $region23: #{attentive_count_net2_forward.1} parent=1 // pred_check_branch
      %42 = sbr.rel (0) target = $region25
    $region24: #{attentive_count_net2_forward.1} parent=1 // pred_region
      _
    $region25: #{attentive_count_net2_forward.1} parent=1 // pred_fallthru
      _
    // Predicated region
    $region26: #{attentive_count_net2_forward.1} parent=1 // pred_check
      _
    $region27: #{attentive_count_net2_forward.1} parent=1 // pred_check_branch
      %44 = sbr.rel (0) target = $region29
    $region28: #{attentive_count_net2_forward.1} parent=1 // pred_region
      _
    $region29: #{attentive_count_net2_forward.1} parent=1 // pred_fallthru
      _
    // Predicated region
    $region30: #{attentive_count_net2_forward.1} parent=1 // pred_check
      _
    $region31: #{attentive_count_net2_forward.1} parent=1 // pred_check_branch
      %46 = sbr.rel (0) target = $region33
    $region32: #{attentive_count_net2_forward.1} parent=1 // pred_region
      _
    $region33: #{attentive_count_net2_forward.1} parent=1 // pred_fallthru
      _
    // Predicated region
    $region34: #{attentive_count_net2_forward.1} parent=1 // pred_check
      _
    $region35: #{attentive_count_net2_forward.1} parent=1 // pred_check_branch
      %48 = sbr.rel (0) target = $region37
    $region36: #{attentive_count_net2_forward.1} parent=1 // pred_region
      _
    $region37: #{attentive_count_net2_forward.1} parent=1 // pred_fallthru
      _
    // Predicated region
    $region38: #{attentive_count_net2_forward.1} parent=1 // pred_check
      _
    $region39: #{attentive_count_net2_forward.1} parent=1 // pred_check_branch
      %50 = sbr.rel (0) target = $region41
    $region40: #{attentive_count_net2_forward.1} parent=1 // pred_region
      _
    $region41: #{attentive_count_net2_forward.1} parent=1 // pred_fallthru
      _
    // Predicated region
    $region42: #{attentive_count_net2_forward.1} parent=1 // pred_check
      _
    $region43: #{attentive_count_net2_forward.1} parent=1 // pred_check_branch
      %52 = sbr.rel (0) target = $region45
    $region44: #{attentive_count_net2_forward.1} parent=1 // pred_region
      _
    $region45: #{attentive_count_net2_forward.1} parent=1 // pred_fallthru
      _
    // Predicated region
    $region46: #{attentive_count_net2_forward.1} parent=1 // pred_check
      _
    $region47: #{attentive_count_net2_forward.1} parent=1 // pred_check_branch
      %54 = sbr.rel (0) target = $region49
    $region48: #{attentive_count_net2_forward.1} parent=1 // pred_region
      _
    $region49: #{attentive_count_net2_forward.1} parent=1 // pred_fallthru
      _
    // Predicated region
    $region50: #{attentive_count_net2_forward.1} parent=1 // pred_check
      _
    $region51: #{attentive_count_net2_forward.1} parent=1 // pred_check_branch
      %56 = sbr.rel (0) target = $region53
    $region52: #{attentive_count_net2_forward.1} parent=1 // pred_region
      _
    $region53: #{attentive_count_net2_forward.1} parent=1 // pred_fallthru
      _
    // Predicated region
    $region54: #{attentive_count_net2_forward.1} parent=1 // pred_check
      _
    $region55: #{attentive_count_net2_forward.1} parent=1 // pred_check_branch
      %58 = sbr.rel (0) target = $region57
    $region56: #{attentive_count_net2_forward.1} parent=1 // pred_region
      _
    $region57: #{attentive_count_net2_forward.1} parent=1 // pred_fallthru
      _
    // Predicated region
    $region58: #{attentive_count_net2_forward.1} parent=1 // pred_check
      _
    $region59: #{attentive_count_net2_forward.1} parent=1 // pred_check_branch
      %60 = sbr.rel (0) target = $region61
    $region60: #{attentive_count_net2_forward.1} parent=1 // pred_region
      _
    $region61: #{attentive_count_net2_forward.1} parent=1 // pred_fallthru
      _
    // Predicated region
    $region62: #{attentive_count_net2_forward.1} parent=1 // pred_check
      _
    $region63: #{attentive_count_net2_forward.1} parent=1 // pred_check_branch
      %62 = sbr.rel (0) target = $region65
    $region64: #{attentive_count_net2_forward.1} parent=1 // pred_region
      _
    $region65: #{attentive_count_net2_forward.1} parent=1 // pred_fallthru
      _
    // Predicated region
    $region66: #{attentive_count_net2_forward.1} parent=1 // pred_check
      _
    $region67: #{attentive_count_net2_forward.1} parent=1 // pred_check_branch
      %64 = sbr.rel (0) target = $region69
    $region68: #{attentive_count_net2_forward.1} parent=1 // pred_region
      _
    $region69: #{attentive_count_net2_forward.1} parent=1 // pred_fallthru
      _
    // Predicated region
    $region70: #{attentive_count_net2_forward.1} parent=1 // pred_check
      _
    $region71: #{attentive_count_net2_forward.1} parent=1 // pred_check_branch
      %66 = sbr.rel (0) target = $region73
    $region72: #{attentive_count_net2_forward.1} parent=1 // pred_region
      _
    $region73: #{attentive_count_net2_forward.1} parent=1 // pred_fallthru
      _
    // Predicated region
    $region74: #{attentive_count_net2_forward.1} parent=1 // pred_check
      _
    $region75: #{attentive_count_net2_forward.1} parent=1 // pred_check_branch
      %68 = sbr.rel (0) target = $region77
    $region76: #{attentive_count_net2_forward.1} parent=1 // pred_region
      _
    $region77: #{attentive_count_net2_forward.1} parent=1 // pred_fallthru
      _
    %v70 = vld [vmem:[%s2] sm:$0xff]
    %v71 = vld [vmem:[%s2 + $0x8] sm:$0xff]
    %v72 = vld [vmem:[%s2 + $0x10] sm:$0xff]
    %v73 = vld [vmem:[%s2 + $0x18] sm:$0xff]
    %v74 = vld [vmem:[%s2 + $0x20] sm:$0xff]
    %v75 = vld [vmem:[%s0] sm:$0xff]
    %v76 = vld [vmem:[%s0 + $0x8] sm:$0xff]
    %v77 = vld [vmem:[%s0 + $0x10] sm:$0xff]
    %v78 = vld [vmem:[%s0 + $0x18] sm:$0xff]
    %v79 = vld [vmem:[%s0 + $0x20] sm:$0xff]
    %vm80 = vcmask 326656
    %v82 = vsel %vm80, %v75, 0
    %v85 = vsel %vm80, %v76, 0
    %v88 = vsel %vm80, %v77, 0
    %v91 = vsel %vm80, %v78, 0
    %v94 = vsel %vm80, %v79, 0
    %96 = vmatprep.subr.mxu0 0.0
    %97 = vmatpush1.msra.mxu0 %v70
    %98 = vmatprep.subr.mxu0 0.0
    %99 = vmatpush1.msra.mxu0 %v71
    %100 = vmatprep.subr.mxu0 0.0
    %101 = vmatpush1.msra.mxu0 %v72
    %102 = vmatprep.subr.mxu0 0.0
    %103 = vmatpush1.msra.mxu0 %v73
    %104 = vmatprep.subr.mxu0 0.0
    %105 = vmatpush1.msra.mxu0 %v74
    %106 = vmatprep.subr.mxu0 0.0
    %107 = vmatpush1.msra.mxu0 0.0
    %108 = vmatprep.subr.mxu0 0.0
    %109 = vmatpush1.msra.mxu0 0.0
    %110 = vmatprep.subr.mxu0 0.0
    %111 = vmatpush1.msra.mxu0 0.0
    %112 = vmatprep.subr.mxu0 0.0
    %113 = vmatpush1.msra.mxu0 0.0
    %114 = vmatprep.subr.mxu0 0.0
    %115 = vmatpush1.msra.mxu0 0.0
    %116 = vmatprep.subr.mxu0 0.0
    %117 = vmatpush1.msra.mxu0 0.0
    %118 = vmatprep.subr.mxu0 0.0
    %119 = vmatpush1.msra.mxu0 0.0
    %120 = vmatprep.subr.mxu0 0.0
    %121 = vmatpush1.msra.mxu0 0.0
    %122 = vmatprep.subr.mxu0 0.0
    %123 = vmatpush1.msra.mxu0 0.0
    %124 = vmatprep.subr.mxu0 0.0
    %125 = vmatpush1.msra.mxu0 0.0
    %126 = vmatprep.subr.mxu0 0.0
    %127 = vmatpush1.msra.mxu0 0.0
    %128 = vmatprep.subr.mxu0 0.0
    %129 = vmatpush1.msra.mxu0 0.0
    %130 = vmatprep.subr.mxu0 0.0
    %131 = vmatpush1.msra.mxu0 0.0
    %132 = vmatprep.subr.mxu0 0.0
    %133 = vmatpush1.msra.mxu0 0.0
    %134 = vmatprep.subr.mxu0 0.0
    %135 = vmatpush1.msra.mxu0 0.0
    %136 = vmatprep.subr.mxu0 0.0
    %137 = vmatpush1.msra.mxu0 0.0
    %138 = vmatprep.subr.mxu0 0.0
    %139 = vmatpush1.msra.mxu0 0.0
    %140 = vmatprep.subr.mxu0 0.0
    %141 = vmatpush1.msra.mxu0 0.0
    %142 = vmatprep.subr.mxu0 0.0
    %143 = vmatpush1.msra.mxu0 0.0
    %144 = vmatprep.subr.mxu0 0.0
    %145 = vmatpush1.msra.mxu0 0.0
    %146 = vmatprep.subr.mxu0 0.0
    %147 = vmatpush1.msra.mxu0 0.0
    %148 = vmatprep.subr.mxu0 0.0
    %149 = vmatpush1.msra.mxu0 0.0
    %150 = vmatprep.subr.mxu0 0.0
    %151 = vmatpush1.msra.mxu0 0.0
    %152 = vmatprep.subr.mxu0 0.0
    %153 = vmatpush1.msra.mxu0 0.0
    %154 = vmatprep.subr.mxu0 0.0
    %155 = vmatpush1.msra.mxu0 0.0
    %156 = vmatprep.subr.mxu0 0.0
    %157 = vmatpush1.msra.mxu0 0.0
    %158 = vmatprep.subr.mxu0 0.0
    %159 = vmatpush1.msra.mxu0 0.0
    %160 = vmatprep.mubr.f32.mxu0 0.0
    %161 = vmatmul.mubr.f32.gmra.mrb[0].mxu0 %v82
    %v162 = vpop.f32.mrb[0].mxu0
    %v163 = vadd.f32 0.0, %v162
    %v164 = vpop.f32.mrb[0].mxu0
    %165 = vmatprep.mubr.f32.mxu0 0.0
    %166 = vmatmul.mubr.f32.gmra.mrb[0].mxu0 %v85
    %v167 = vpop.f32.mrb[0].mxu0
    %v168 = vadd.f32 0.0, %v167
    %v169 = vpop.f32.mrb[0].mxu0
    %170 = vmatprep.mubr.f32.mxu0 0.0
    %171 = vmatmul.mubr.f32.gmra.mrb[0].mxu0 %v88
    %v172 = vpop.f32.mrb[0].mxu0
    %v173 = vadd.f32 0.0, %v172
    %v174 = vpop.f32.mrb[0].mxu0
    %175 = vmatprep.mubr.f32.mxu0 0.0
    %176 = vmatmul.mubr.f32.gmra.mrb[0].mxu0 %v91
    %v177 = vpop.f32.mrb[0].mxu0
    %v178 = vadd.f32 0.0, %v177
    %v179 = vpop.f32.mrb[0].mxu0
    %180 = vmatprep.mubr.f32.mxu0 0.0
    %181 = vmatmul.mubr.f32.gmra.mrb[0].mxu0 %v94
    %v182 = vpop.f32.mrb[0].mxu0
    %v183 = vadd.f32 0.0, %v182
    %v184 = vpop.f32.mrb[0].mxu0
    %185 = vdwg.mxu0
    %v186 = vld [vmem:[%s4] sm:$0xff]
    %v187 = vld [vmem:[%s5] sm:$0x1]
    %v189 = vlaneseq
    %v190 = vshrl.u32 %v189, 7
    %v191 = vsub.s32 0, %v190
    %v192 = vrot.slane %v187, %v191
    %vm194 = vcmask 64512
    %v196 = vsel %vm194, %v163, 0
    %v199 = vsel %vm194, %v168, 0
    %v202 = vsel %vm194, %v173, 0
    %v205 = vsel %vm194, %v178, 0
    %v208 = vsel %vm194, %v183, 0
    %210 = vmatprep.subr.mxu0 0.0
    %211 = vmatpush1.msra.mxu0 %v186
    %212 = vmatprep.subr.mxu0 0.0
    %213 = vmatpush1.msra.mxu0 0.0
    %214 = vmatprep.subr.mxu0 0.0
    %215 = vmatpush1.msra.mxu0 0.0
    %216 = vmatprep.subr.mxu0 0.0
    %217 = vmatpush1.msra.mxu0 0.0
    %218 = vmatprep.subr.mxu0 0.0
    %219 = vmatpush1.msra.mxu0 0.0
    %220 = vmatprep.subr.mxu0 0.0
    %221 = vmatpush1.msra.mxu0 0.0
    %222 = vmatprep.subr.mxu0 0.0
    %223 = vmatpush1.msra.mxu0 0.0
    %224 = vmatprep.subr.mxu0 0.0
    %225 = vmatpush1.msra.mxu0 0.0
    %226 = vmatprep.subr.mxu0 0.0
    %227 = vmatpush1.msra.mxu0 0.0
    %228 = vmatprep.subr.mxu0 0.0
    %229 = vmatpush1.msra.mxu0 0.0
    %230 = vmatprep.subr.mxu0 0.0
    %231 = vmatpush1.msra.mxu0 0.0
    %232 = vmatprep.subr.mxu0 0.0
    %233 = vmatpush1.msra.mxu0 0.0
    %234 = vmatprep.subr.mxu0 0.0
    %235 = vmatpush1.msra.mxu0 0.0
    %236 = vmatprep.subr.mxu0 0.0
    %237 = vmatpush1.msra.mxu0 0.0
    %238 = vmatprep.subr.mxu0 0.0
    %239 = vmatpush1.msra.mxu0 0.0
    %240 = vmatprep.subr.mxu0 0.0
    %241 = vmatpush1.msra.mxu0 0.0
    %242 = vmatprep.subr.mxu0 0.0
    %243 = vmatpush1.msra.mxu0 0.0
    %244 = vmatprep.subr.mxu0 0.0
    %245 = vmatpush1.msra.mxu0 0.0
    %246 = vmatprep.subr.mxu0 0.0
    %247 = vmatpush1.msra.mxu0 0.0
    %248 = vmatprep.subr.mxu0 0.0
    %249 = vmatpush1.msra.mxu0 0.0
    %250 = vmatprep.subr.mxu0 0.0
    %251 = vmatpush1.msra.mxu0 0.0
    %252 = vmatprep.subr.mxu0 0.0
    %253 = vmatpush1.msra.mxu0 0.0
    %254 = vmatprep.subr.mxu0 0.0
    %255 = vmatpush1.msra.mxu0 0.0
    %256 = vmatprep.subr.mxu0 0.0
    %257 = vmatpush1.msra.mxu0 0.0
    %258 = vmatprep.subr.mxu0 0.0
    %259 = vmatpush1.msra.mxu0 0.0
    %260 = vmatprep.subr.mxu0 0.0
    %261 = vmatpush1.msra.mxu0 0.0
    %262 = vmatprep.subr.mxu0 0.0
    %263 = vmatpush1.msra.mxu0 0.0
    %264 = vmatprep.subr.mxu0 0.0
    %265 = vmatpush1.msra.mxu0 0.0
    %266 = vmatprep.subr.mxu0 0.0
    %267 = vmatpush1.msra.mxu0 0.0
    %268 = vmatprep.subr.mxu0 0.0
    %269 = vmatpush1.msra.mxu0 0.0
    %270 = vmatprep.subr.mxu0 0.0
    %271 = vmatpush1.msra.mxu0 0.0
    %272 = vmatprep.subr.mxu0 0.0
    %273 = vmatpush1.msra.mxu0 0.0
    %274 = vmatprep.mubr.f32.mxu0 0.0
    %275 = vmatmul.mubr.f32.gmra.mrb[0].mxu0 %v196
    %v276 = vpop.f32.mrb[0].mxu0
    %v277 = vadd.f32 %v192, %v276
    %v278 = vpop.f32.mrb[0].mxu0
    %279 = vmatprep.mubr.f32.mxu0 0.0
    %280 = vmatmul.mubr.f32.gmra.mrb[0].mxu0 %v199
    %v281 = vpop.f32.mrb[0].mxu0
    %v282 = vadd.f32 %v192, %v281
    %v283 = vpop.f32.mrb[0].mxu0
    %284 = vmatprep.mubr.f32.mxu0 0.0
    %285 = vmatmul.mubr.f32.gmra.mrb[0].mxu0 %v202
    %v286 = vpop.f32.mrb[0].mxu0
    %v287 = vadd.f32 %v192, %v286
    %v288 = vpop.f32.mrb[0].mxu0
    %289 = vmatprep.mubr.f32.mxu0 0.0
    %290 = vmatmul.mubr.f32.gmra.mrb[0].mxu0 %v205
    %v291 = vpop.f32.mrb[0].mxu0
    %v292 = vadd.f32 %v192, %v291
    %v293 = vpop.f32.mrb[0].mxu0
    %294 = vmatprep.mubr.f32.mxu0 0.0
    %295 = vmatmul.mubr.f32.gmra.mrb[0].mxu0 %v208
    %v296 = vpop.f32.mrb[0].mxu0
    %v297 = vadd.f32 %v192, %v296
    %v298 = vpop.f32.mrb[0].mxu0
    %299 = vdwg.mxu0
    %v300 = vmax.f32 %v277, 0.0
    %v301 = vmax.f32 %v282, 0.0
    %v302 = vmax.f32 %v287, 0.0
    %v303 = vmax.f32 %v292, 0.0
    %v304 = vmax.f32 %v297, 0.0
    %v305 = vld [vmem:[%s3] sm:$0xff]
    %v306 = vld [vmem:[%s3 + $0x8] sm:$0xff]
    %v307 = vld [vmem:[%s3 + $0x10] sm:$0xff]
    %v308 = vld [vmem:[%s3 + $0x18] sm:$0xff]
    %v309 = vld [vmem:[%s3 + $0x20] sm:$0xff]
    %v310 = vmul.f32 %v300, %v305
    %v311 = vmul.f32 %v301, %v306
    %v312 = vmul.f32 %v302, %v307
    %v313 = vmul.f32 %v303, %v308
    %v314 = vmul.f32 %v304, %v309
    %315 = vmatprep.subr.mxu0 0.0
    %316 = vmatpush1.msra.mxu0 %v310
    %317 = vmatprep.subr.mxu0 0.0
    %318 = vmatpush1.msra.mxu0 %v311
    %319 = vmatprep.subr.mxu0 0.0
    %320 = vmatpush1.msra.mxu0 %v312
    %321 = vmatprep.subr.mxu0 0.0
    %322 = vmatpush1.msra.mxu0 %v313
    %323 = vmatprep.subr.mxu0 0.0
    %324 = vmatpush1.msra.mxu0 %v314
    %325 = vmatprep.subr.mxu0 0.0
    %326 = vmatpush1.msra.mxu0 0.0
    %327 = vmatprep.subr.mxu0 0.0
    %328 = vmatpush1.msra.mxu0 0.0
    %329 = vmatprep.subr.mxu0 0.0
    %330 = vmatpush1.msra.mxu0 0.0
    %331 = vmatprep.subr.mxu0 0.0
    %332 = vmatpush1.msra.mxu0 0.0
    %333 = vmatprep.subr.mxu0 0.0
    %334 = vmatpush1.msra.mxu0 0.0
    %335 = vmatprep.subr.mxu0 0.0
    %336 = vmatpush1.msra.mxu0 0.0
    %337 = vmatprep.subr.mxu0 0.0
    %338 = vmatpush1.msra.mxu0 0.0
    %339 = vmatprep.subr.mxu0 0.0
    %340 = vmatpush1.msra.mxu0 0.0
    %341 = vmatprep.subr.mxu0 0.0
    %342 = vmatpush1.msra.mxu0 0.0
    %343 = vmatprep.subr.mxu0 0.0
    %344 = vmatpush1.msra.mxu0 0.0
    %345 = vmatprep.subr.mxu0 0.0
    %346 = vmatpush1.msra.mxu0 0.0
    %347 = vmatprep.subr.mxu0 0.0
    %348 = vmatpush1.msra.mxu0 0.0
    %349 = vmatprep.subr.mxu0 0.0
    %350 = vmatpush1.msra.mxu0 0.0
    %351 = vmatprep.subr.mxu0 0.0
    %352 = vmatpush1.msra.mxu0 0.0
    %353 = vmatprep.subr.mxu0 0.0
    %354 = vmatpush1.msra.mxu0 0.0
    %355 = vmatprep.subr.mxu0 0.0
    %356 = vmatpush1.msra.mxu0 0.0
    %357 = vmatprep.subr.mxu0 0.0
    %358 = vmatpush1.msra.mxu0 0.0
    %359 = vmatprep.subr.mxu0 0.0
    %360 = vmatpush1.msra.mxu0 0.0
    %361 = vmatprep.subr.mxu0 0.0
    %362 = vmatpush1.msra.mxu0 0.0
    %363 = vmatprep.subr.mxu0 0.0
    %364 = vmatpush1.msra.mxu0 0.0
    %365 = vmatprep.subr.mxu0 0.0
    %366 = vmatpush1.msra.mxu0 0.0
    %367 = vmatprep.subr.mxu0 0.0
    %368 = vmatpush1.msra.mxu0 0.0
    %369 = vmatprep.subr.mxu0 0.0
    %370 = vmatpush1.msra.mxu0 0.0
    %371 = vmatprep.subr.mxu0 0.0
    %372 = vmatpush1.msra.mxu0 0.0
    %373 = vmatprep.subr.mxu0 0.0
    %374 = vmatpush1.msra.mxu0 0.0
    %375 = vmatprep.subr.mxu0 0.0
    %376 = vmatpush1.msra.mxu0 0.0
    %377 = vmatprep.subr.mxu0 0.0
    %378 = vmatpush1.msra.mxu0 0.0
    %379 = vmatprep.mubr.f32.mxu0 0.0
    %380 = vmatmul.mubr.f32.gmra.mrb[0].mxu0 %v82
    %v381 = vpop.f32.mrb[0].mxu0
    %v382 = vadd.f32 0.0, %v381
    %v383 = vpop.f32.mrb[0].mxu0
    %384 = vmatprep.mubr.f32.mxu0 0.0
    %385 = vmatmul.mubr.f32.gmra.mrb[0].mxu0 %v85
    %v386 = vpop.f32.mrb[0].mxu0
    %v387 = vadd.f32 0.0, %v386
    %v388 = vpop.f32.mrb[0].mxu0
    %389 = vmatprep.mubr.f32.mxu0 0.0
    %390 = vmatmul.mubr.f32.gmra.mrb[0].mxu0 %v88
    %v391 = vpop.f32.mrb[0].mxu0
    %v392 = vadd.f32 0.0, %v391
    %v393 = vpop.f32.mrb[0].mxu0
    %394 = vmatprep.mubr.f32.mxu0 0.0
    %395 = vmatmul.mubr.f32.gmra.mrb[0].mxu0 %v91
    %v396 = vpop.f32.mrb[0].mxu0
    %v397 = vadd.f32 0.0, %v396
    %v398 = vpop.f32.mrb[0].mxu0
    %399 = vmatprep.mubr.f32.mxu0 0.0
    %400 = vmatmul.mubr.f32.gmra.mrb[0].mxu0 %v94
    %v401 = vpop.f32.mrb[0].mxu0
    %v402 = vadd.f32 0.0, %v401
    %v403 = vpop.f32.mrb[0].mxu0
    %404 = vdwg.mxu0
    %v405 = vld [vmem:[%s6] sm:$0xff]
    %v406 = vld [vmem:[%s6 + $0x8] sm:$0xff]
    %v407 = vld [vmem:[%s6 + $0x10] sm:$0xff]
    %v408 = vld [vmem:[%s6 + $0x18] sm:$0xff]
    %vm409 = vcmask 261120
    %v411 = vsel %vm409, %v382, 0
    %v414 = vsel %vm409, %v387, 0
    %v417 = vsel %vm409, %v392, 0
    %v420 = vsel %vm409, %v397, 0
    %v423 = vsel %vm409, %v402, 0
    %425 = vmatprep.subr.mxu0 0.0
    %426 = vmatpush1.msra.mxu0 %v405
    %427 = vmatprep.subr.mxu0 0.0
    %428 = vmatpush1.msra.mxu0 %v406
    %429 = vmatprep.subr.mxu0 0.0
    %430 = vmatpush1.msra.mxu0 %v407
    %431 = vmatprep.subr.mxu0 0.0
    %432 = vmatpush1.msra.mxu0 %v408
    %433 = vmatprep.subr.mxu0 0.0
    %434 = vmatpush1.msra.mxu0 0.0
    %435 = vmatprep.subr.mxu0 0.0
    %436 = vmatpush1.msra.mxu0 0.0
    %437 = vmatprep.subr.mxu0 0.0
    %438 = vmatpush1.msra.mxu0 0.0
    %439 = vmatprep.subr.mxu0 0.0
    %440 = vmatpush1.msra.mxu0 0.0
    %441 = vmatprep.subr.mxu0 0.0
    %442 = vmatpush1.msra.mxu0 0.0
    %443 = vmatprep.subr.mxu0 0.0
    %444 = vmatpush1.msra.mxu0 0.0
    %445 = vmatprep.subr.mxu0 0.0
    %446 = vmatpush1.msra.mxu0 0.0
    %447 = vmatprep.subr.mxu0 0.0
    %448 = vmatpush1.msra.mxu0 0.0
    %449 = vmatprep.subr.mxu0 0.0
    %450 = vmatpush1.msra.mxu0 0.0
    %451 = vmatprep.subr.mxu0 0.0
    %452 = vmatpush1.msra.mxu0 0.0
    %453 = vmatprep.subr.mxu0 0.0
    %454 = vmatpush1.msra.mxu0 0.0
    %455 = vmatprep.subr.mxu0 0.0
    %456 = vmatpush1.msra.mxu0 0.0
    %457 = vmatprep.subr.mxu0 0.0
    %458 = vmatpush1.msra.mxu0 0.0
    %459 = vmatprep.subr.mxu0 0.0
    %460 = vmatpush1.msra.mxu0 0.0
    %461 = vmatprep.subr.mxu0 0.0
    %462 = vmatpush1.msra.mxu0 0.0
    %463 = vmatprep.subr.mxu0 0.0
    %464 = vmatpush1.msra.mxu0 0.0
    %465 = vmatprep.subr.mxu0 0.0
    %466 = vmatpush1.msra.mxu0 0.0
    %467 = vmatprep.subr.mxu0 0.0
    %468 = vmatpush1.msra.mxu0 0.0
    %469 = vmatprep.subr.mxu0 0.0
    %470 = vmatpush1.msra.mxu0 0.0
    %471 = vmatprep.subr.mxu0 0.0
    %472 = vmatpush1.msra.mxu0 0.0
    %473 = vmatprep.subr.mxu0 0.0
    %474 = vmatpush1.msra.mxu0 0.0
    %475 = vmatprep.subr.mxu0 0.0
    %476 = vmatpush1.msra.mxu0 0.0
    %477 = vmatprep.subr.mxu0 0.0
    %478 = vmatpush1.msra.mxu0 0.0
    %479 = vmatprep.subr.mxu0 0.0
    %480 = vmatpush1.msra.mxu0 0.0
    %481 = vmatprep.subr.mxu0 0.0
    %482 = vmatpush1.msra.mxu0 0.0
    %483 = vmatprep.subr.mxu0 0.0
    %484 = vmatpush1.msra.mxu0 0.0
    %485 = vmatprep.subr.mxu0 0.0
    %486 = vmatpush1.msra.mxu0 0.0
    %487 = vmatprep.subr.mxu0 0.0
    %488 = vmatpush1.msra.mxu0 0.0
    %489 = vmatprep.mubr.f32.mxu0 0.0
    %490 = vmatmul.mubr.f32.gmra.mrb[0].mxu0 %v411
    %v491 = vpop.f32.mrb[0].mxu0
    %v492 = vadd.f32 0.0, %v491
    %v493 = vpop.f32.mrb[0].mxu0
    %494 = vmatprep.mubr.f32.mxu0 0.0
    %495 = vmatmul.mubr.f32.gmra.mrb[0].mxu0 %v414
    %v496 = vpop.f32.mrb[0].mxu0
    %v497 = vadd.f32 0.0, %v496
    %v498 = vpop.f32.mrb[0].mxu0
    %499 = vmatprep.mubr.f32.mxu0 0.0
    %500 = vmatmul.mubr.f32.gmra.mrb[0].mxu0 %v417
    %v501 = vpop.f32.mrb[0].mxu0
    %v502 = vadd.f32 0.0, %v501
    %v503 = vpop.f32.mrb[0].mxu0
    %504 = vmatprep.mubr.f32.mxu0 0.0
    %505 = vmatmul.mubr.f32.gmra.mrb[0].mxu0 %v420
    %v506 = vpop.f32.mrb[0].mxu0
    %v507 = vadd.f32 0.0, %v506
    %v508 = vpop.f32.mrb[0].mxu0
    %509 = vmatprep.mubr.f32.mxu0 0.0
    %510 = vmatmul.mubr.f32.gmra.mrb[0].mxu0 %v423
    %v511 = vpop.f32.mrb[0].mxu0
    %v512 = vadd.f32 0.0, %v511
    %v513 = vpop.f32.mrb[0].mxu0
    %514 = vdwg.mxu0
    %v515 = vld [vmem:[%s7] sm:$0x1]
    %v517 = vlaneseq
    %v518 = vshrl.u32 %v517, 7
    %v519 = vsub.s32 0, %v518
    %v520 = vrot.slane %v515, %v519
    %v522 = vadd.f32 %v492, %v520
    %v523 = vadd.f32 %v497, %v520
    %v524 = vmax.f32 %v522, 0.0
    %v525 = vmax.f32 %v523, 0.0
    %v526 = vld [vmem:[%s8] sm:$0x1]
    %v528 = vlaneseq
    %v529 = vshrl.u32 %v528, 7
    %v530 = vsub.s32 0, %v529
    %v531 = vrot.slane %v526, %v530
    %v533 = vadd.f32 %v502, %v531
    %v534 = vadd.f32 %v507, %v531
    %v535 = vadd.f32 %v512, %v531
    %v536 = vmax.f32 %v533, 0.0
    %v537 = vmax.f32 %v534, 0.0
    %v538 = vmax.f32 %v535, 0.0
    %539 = vst.msk [vmem:[#allocation6] sm:$0xff] %vm409, %v524
    %540 = vst.msk [vmem:[#allocation6 + $0x8] sm:$0xff] %vm409, %v525
    %541 = vst.msk [vmem:[#allocation8] sm:$0xff] %vm409, %v536
    %542 = vst.msk [vmem:[#allocation8 + $0x8] sm:$0xff] %vm409, %v537
    %543 = vst.msk [vmem:[#allocation8 + $0x10] sm:$0xff] %vm409, %v538
    %v544 = vld [vmem:[%s9] sm:$0xff]
    %v546 = vsel %vm194, %v70, 0
    %v549 = vsel %vm194, %v71, 0
    %v552 = vsel %vm194, %v72, 0
    %v555 = vsel %vm194, %v73, 0
    %v558 = vsel %vm194, %v74, 0
    %560 = vmatprep.subr.mxu0 0.0
    %561 = vmatpush1.msra.mxu0 %v544
    %562 = vmatprep.subr.mxu0 0.0
    %563 = vmatpush1.msra.mxu0 0.0
    %564 = vmatprep.subr.mxu0 0.0
    %565 = vmatpush1.msra.mxu0 0.0
    %566 = vmatprep.subr.mxu0 0.0
    %567 = vmatpush1.msra.mxu0 0.0
    %568 = vmatprep.subr.mxu0 0.0
    %569 = vmatpush1.msra.mxu0 0.0
    %570 = vmatprep.subr.mxu0 0.0
    %571 = vmatpush1.msra.mxu0 0.0
    %572 = vmatprep.subr.mxu0 0.0
    %573 = vmatpush1.msra.mxu0 0.0
    %574 = vmatprep.subr.mxu0 0.0
    %575 = vmatpush1.msra.mxu0 0.0
    %576 = vmatprep.subr.mxu0 0.0
    %577 = vmatpush1.msra.mxu0 0.0
    %578 = vmatprep.subr.mxu0 0.0
    %579 = vmatpush1.msra.mxu0 0.0
    %580 = vmatprep.subr.mxu0 0.0
    %581 = vmatpush1.msra.mxu0 0.0
    %582 = vmatprep.subr.mxu0 0.0
    %583 = vmatpush1.msra.mxu0 0.0
    %584 = vmatprep.subr.mxu0 0.0
    %585 = vmatpush1.msra.mxu0 0.0
    %586 = vmatprep.subr.mxu0 0.0
    %587 = vmatpush1.msra.mxu0 0.0
    %588 = vmatprep.subr.mxu0 0.0
    %589 = vmatpush1.msra.mxu0 0.0
    %590 = vmatprep.subr.mxu0 0.0
    %591 = vmatpush1.msra.mxu0 0.0
    %592 = vmatprep.subr.mxu0 0.0
    %593 = vmatpush1.msra.mxu0 0.0
    %594 = vmatprep.subr.mxu0 0.0
    %595 = vmatpush1.msra.mxu0 0.0
    %596 = vmatprep.subr.mxu0 0.0
    %597 = vmatpush1.msra.mxu0 0.0
    %598 = vmatprep.subr.mxu0 0.0
    %599 = vmatpush1.msra.mxu0 0.0
    %600 = vmatprep.subr.mxu0 0.0
    %601 = vmatpush1.msra.mxu0 0.0
    %602 = vmatprep.subr.mxu0 0.0
    %603 = vmatpush1.msra.mxu0 0.0
    %604 = vmatprep.subr.mxu0 0.0
    %605 = vmatpush1.msra.mxu0 0.0
    %606 = vmatprep.subr.mxu0 0.0
    %607 = vmatpush1.msra.mxu0 0.0
    %608 = vmatprep.subr.mxu0 0.0
    %609 = vmatpush1.msra.mxu0 0.0
    %610 = vmatprep.subr.mxu0 0.0
    %611 = vmatpush1.msra.mxu0 0.0
    %612 = vmatprep.subr.mxu0 0.0
    %613 = vmatpush1.msra.mxu0 0.0
    %614 = vmatprep.subr.mxu0 0.0
    %615 = vmatpush1.msra.mxu0 0.0
    %616 = vmatprep.subr.mxu0 0.0
    %617 = vmatpush1.msra.mxu0 0.0
    %618 = vmatprep.subr.mxu0 0.0
    %619 = vmatpush1.msra.mxu0 0.0
    %620 = vmatprep.subr.mxu0 0.0
    %621 = vmatpush1.msra.mxu0 0.0
    %622 = vmatprep.subr.mxu0 0.0
    %623 = vmatpush1.msra.mxu0 0.0
    %624 = vmatprep.mubr.f32.mxu0 0.0
    %625 = vmatmul.mubr.f32.gmra.mrb[0].mxu0 %v546
    %v626 = vpop.f32.mrb[0].mxu0
    %v627 = vadd.f32 0.0, %v626
    %v628 = vpop.f32.mrb[0].mxu0
    %629 = vmatprep.mubr.f32.mxu0 0.0
    %630 = vmatmul.mubr.f32.gmra.mrb[0].mxu0 %v549
    %v631 = vpop.f32.mrb[0].mxu0
    %v632 = vadd.f32 0.0, %v631
    %v633 = vpop.f32.mrb[0].mxu0
    %634 = vmatprep.mubr.f32.mxu0 0.0
    %635 = vmatmul.mubr.f32.gmra.mrb[0].mxu0 %v552
    %v636 = vpop.f32.mrb[0].mxu0
    %v637 = vadd.f32 0.0, %v636
    %v638 = vpop.f32.mrb[0].mxu0
    %639 = vmatprep.mubr.f32.mxu0 0.0
    %640 = vmatmul.mubr.f32.gmra.mrb[0].mxu0 %v555
    %v641 = vpop.f32.mrb[0].mxu0
    %v642 = vadd.f32 0.0, %v641
    %v643 = vpop.f32.mrb[0].mxu0
    %644 = vmatprep.mubr.f32.mxu0 0.0
    %645 = vmatmul.mubr.f32.gmra.mrb[0].mxu0 %v558
    %v646 = vpop.f32.mrb[0].mxu0
    %v647 = vadd.f32 0.0, %v646
    %v648 = vpop.f32.mrb[0].mxu0
    %649 = vdwg.mxu0
    %v650 = vld [vmem:[%s10] sm:$0x1]
    %v652 = vlaneseq
    %v653 = vshrl.u32 %v652, 7
    %v654 = vsub.s32 0, %v653
    %v655 = vrot.slane %v650, %v654
    %v657 = vmul.f32 %v627, %v655
    %v658 = vmul.f32 %v632, %v655
    %v659 = vmul.f32 %v637, %v655
    %v660 = vmul.f32 %v642, %v655
    %v661 = vmul.f32 %v647, %v655
    %v662 = vsel %vm409, %v657, 0.0
    %663 = vadd.xlane.f32.xlu0 %v662
    %v664 = vpop.xlane.xlu0 %663
    %v665 = vsel %vm409, %v658, 0.0
    %666 = vadd.xlane.f32.xlu0 %v665
    %v667 = vpop.xlane.xlu0 %666
    %v668 = vsel %vm409, %v659, 0.0
    %669 = vadd.xlane.f32.xlu0 %v668
    %v670 = vpop.xlane.xlu0 %669
    %v671 = vsel %vm409, %v660, 0.0
    %672 = vadd.xlane.f32.xlu0 %v671
    %v673 = vpop.xlane.xlu0 %672
    %v674 = vsel %vm409, %v661, 0.0
    %675 = vadd.xlane.f32.xlu0 %v674
    %v676 = vpop.xlane.xlu0 %675
    %v677 = vld [vmem:[%s11] sm:$0x1]
    %v679 = vlaneseq
    %v680 = vshrl.u32 %v679, 7
    %v681 = vsub.s32 0, %v680
    %v682 = vrot.slane %v677, %v681
    %v684 = vmul.f32 %v627, %v682
    %v685 = vmul.f32 %v632, %v682
    %v686 = vmul.f32 %v637, %v682
    %v687 = vmul.f32 %v642, %v682
    %v688 = vmul.f32 %v647, %v682
    %v689 = vsel %vm409, %v684, 0.0
    %690 = vadd.xlane.f32.xlu0 %v689
    %v691 = vpop.xlane.xlu0 %690
    %v692 = vsel %vm409, %v685, 0.0
    %693 = vadd.xlane.f32.xlu0 %v692
    %v694 = vpop.xlane.xlu0 %693
    %v695 = vsel %vm409, %v686, 0.0
    %696 = vadd.xlane.f32.xlu0 %v695
    %v697 = vpop.xlane.xlu0 %696
    %v698 = vsel %vm409, %v687, 0.0
    %699 = vadd.xlane.f32.xlu0 %v698
    %v700 = vpop.xlane.xlu0 %699
    %v701 = vsel %vm409, %v688, 0.0
    %702 = vadd.xlane.f32.xlu0 %v701
    %v703 = vpop.xlane.xlu0 %702
    %704 = vxpose.xlu0.b32.start [1/16] %v691, 128
    %705 = vxpose.xlu0.b32.cont [2/16] %v694, 128
    %706 = vxpose.xlu0.b32.cont [3/16] %v697, 128
    %707 = vxpose.xlu0.b32.cont [4/16] %v700, 128
    %708 = vxpose.xlu0.b32.cont [5/16] %v703, 128
    %709 = vxpose.xlu0.b32.cont [6/16] 0.0, 128
    %710 = vxpose.xlu0.b32.cont [7/16] 0.0, 128
    %711 = vxpose.xlu0.b32.cont [8/16] 0.0, 128
    %712 = vxpose.xlu0.b32.cont [9/16] 0.0, 128
    %713 = vxpose.xlu0.b32.cont [10/16] 0.0, 128
    %714 = vxpose.xlu0.b32.cont [11/16] 0.0, 128
    %715 = vxpose.xlu0.b32.cont [12/16] 0.0, 128
    %716 = vxpose.xlu0.b32.cont [13/16] 0.0, 128
    %717 = vxpose.xlu0.b32.cont [14/16] 0.0, 128
    %718 = vxpose.xlu0.b32.cont [15/16] 0.0, 128
    %719 = vxpose.xlu0.b32.end [16/16] 0.0, 128
    %v720 = vpop.trf.xlu0
    %v721 = vpop.trf.xlu0
    %v722 = vpop.trf.xlu0
    %v723 = vpop.trf.xlu0
    %v724 = vpop.trf.xlu0
    %v725 = vpop.trf.xlu0
    %v726 = vpop.trf.xlu0
    %v727 = vpop.trf.xlu0
    %v728 = vpop.trf.xlu0
    %v729 = vpop.trf.xlu0
    %v730 = vpop.trf.xlu0
    %v731 = vpop.trf.xlu0
    %v732 = vpop.trf.xlu0
    %v733 = vpop.trf.xlu0
    %v734 = vpop.trf.xlu0
    %v735 = vpop.trf.xlu0
    %v736 = vlaneseq
    %v737 = vshrl.u32 %v736, 7
    %v738 = vsub.s32 0, %v737
    %v739 = vrot.slane %v720, %v738
    %v740 = vadd.f32 %v664, %v739
    %v741 = vadd.f32 %v667, %v739
    %v742 = vadd.f32 %v670, %v739
    %v743 = vadd.f32 %v673, %v739
    %v744 = vadd.f32 %v676, %v739
    %vm745 = vcmp.gt.f32.partialorder %v740, 0.0
    %vm746 = vcmp.gt.f32.partialorder %v741, 0.0
    %vm747 = vcmp.gt.f32.partialorder %v742, 0.0
    %vm748 = vcmp.gt.f32.partialorder %v743, 0.0
    %vm749 = vcmp.gt.f32.partialorder %v744, 0.0
    %v750 = vmul.f32 %v740, 0.2
    %v751 = vmul.f32 %v741, 0.2
    %v752 = vmul.f32 %v742, 0.2
    %v753 = vmul.f32 %v743, 0.2
    %v754 = vmul.f32 %v744, 0.2
    %v755 = vsel %vm745, %v740, %v750
    %v756 = vsel %vm746, %v741, %v751
    %v757 = vsel %vm747, %v742, %v752
    %v758 = vsel %vm748, %v743, %v753
    %v759 = vsel %vm749, %v744, %v754
    %v760 = vld [vmem:[%s1] sm:$0xff]
    %v761 = vld [vmem:[%s1 + $0x8] sm:$0xff]
    %v762 = vld [vmem:[%s1 + $0x10] sm:$0xff]
    %v763 = vld [vmem:[%s1 + $0x18] sm:$0xff]
    %v764 = vld [vmem:[%s1 + $0x20] sm:$0xff]
    %v765 = vadd.f32 %v755, %v760
    %v766 = vadd.f32 %v756, %v761
    %v767 = vadd.f32 %v757, %v762
    %v768 = vadd.f32 %v758, %v763
    %v769 = vadd.f32 %v759, %v764
    %v770 = vsel %vm80, %v765, -inf
    %771 = vmax.xlane.f32.xlu0 %v770
    %v772 = vpop.xlane.xlu0 %771
    %v773 = vsel %vm80, %v766, -inf
    %774 = vmax.xlane.f32.xlu0 %v773
    %v775 = vpop.xlane.xlu0 %774
    %v776 = vsel %vm80, %v767, -inf
    %777 = vmax.xlane.f32.xlu0 %v776
    %v778 = vpop.xlane.xlu0 %777
    %v779 = vsel %vm80, %v768, -inf
    %780 = vmax.xlane.f32.xlu0 %v779
    %v781 = vpop.xlane.xlu0 %780
    %v782 = vsel %vm80, %v769, -inf
    %783 = vmax.xlane.f32.xlu0 %v782
    %v784 = vpop.xlane.xlu0 %783
    %v785 = vsub.f32 %v765, %v772
    %v786 = vsub.f32 %v766, %v775
    %v787 = vsub.f32 %v767, %v778
    %v788 = vsub.f32 %v768, %v781
    %v789 = vsub.f32 %v769, %v784
    %v790 = vmul.f32 %v785, 1.442695
    %v791 = vpow.pop %v790
    %v792 = vmul.f32 %v786, 1.442695
    %v793 = vpow.pop %v792
    %v794 = vmul.f32 %v787, 1.442695
    %v795 = vpow.pop %v794
    %v796 = vmul.f32 %v788, 1.442695
    %v797 = vpow.pop %v796
    %v798 = vmul.f32 %v789, 1.442695
    %v799 = vpow.pop %v798
    %v800 = vsel %vm80, %v791, 0.0
    %801 = vadd.xlane.f32.xlu0 %v800
    %v802 = vpop.xlane.xlu0 %801
    %v803 = vsel %vm80, %v793, 0.0
    %804 = vadd.xlane.f32.xlu0 %v803
    %v805 = vpop.xlane.xlu0 %804
    %v806 = vsel %vm80, %v795, 0.0
    %807 = vadd.xlane.f32.xlu0 %v806
    %v808 = vpop.xlane.xlu0 %807
    %v809 = vsel %vm80, %v797, 0.0
    %810 = vadd.xlane.f32.xlu0 %v809
    %v811 = vpop.xlane.xlu0 %810
    %v812 = vsel %vm80, %v799, 0.0
    %813 = vadd.xlane.f32.xlu0 %v812
    %v814 = vpop.xlane.xlu0 %813
    %v815 = vmax.f32 %v802, 1e-30
    %v816 = vmax.f32 %v805, 1e-30
    %v817 = vmax.f32 %v808, 1e-30
    %v818 = vmax.f32 %v811, 1e-30
    %v819 = vmax.f32 %v814, 1e-30
    %v820 = vrcp.pop %v815
    %v821 = vrcp.pop %v816
    %v822 = vrcp.pop %v817
    %v823 = vrcp.pop %v818
    %v824 = vrcp.pop %v819
    %v825 = vmul.f32 %v791, %v820
    %v826 = vmul.f32 %v793, %v821
    %v827 = vmul.f32 %v795, %v822
    %v828 = vmul.f32 %v797, %v823
    %v829 = vmul.f32 %v799, %v824
    %v831 = vsel %vm80, %v825, 0
    %v834 = vsel %vm80, %v826, 0
    %v837 = vsel %vm80, %v827, 0
    %v840 = vsel %vm80, %v828, 0
    %v843 = vsel %vm80, %v829, 0
    %845 = vmatprep.subr.mxu0 0.0
    %846 = vmatpush1.msra.mxu0 %v627
    %847 = vmatprep.subr.mxu0 0.0
    %848 = vmatpush1.msra.mxu0 %v632
    %849 = vmatprep.subr.mxu0 0.0
    %850 = vmatpush1.msra.mxu0 %v637
    %851 = vmatprep.subr.mxu0 0.0
    %852 = vmatpush1.msra.mxu0 %v642
    %853 = vmatprep.subr.mxu0 0.0
    %854 = vmatpush1.msra.mxu0 %v647
    %855 = vmatprep.subr.mxu0 0.0
    %856 = vmatpush1.msra.mxu0 0.0
    %857 = vmatprep.subr.mxu0 0.0
    %858 = vmatpush1.msra.mxu0 0.0
    %859 = vmatprep.subr.mxu0 0.0
    %860 = vmatpush1.msra.mxu0 0.0
    %861 = vmatprep.subr.mxu0 0.0
    %862 = vmatpush1.msra.mxu0 0.0
    %863 = vmatprep.subr.mxu0 0.0
    %864 = vmatpush1.msra.mxu0 0.0
    %865 = vmatprep.subr.mxu0 0.0
    %866 = vmatpush1.msra.mxu0 0.0
    %867 = vmatprep.subr.mxu0 0.0
    %868 = vmatpush1.msra.mxu0 0.0
    %869 = vmatprep.subr.mxu0 0.0
    %870 = vmatpush1.msra.mxu0 0.0
    %871 = vmatprep.subr.mxu0 0.0
    %872 = vmatpush1.msra.mxu0 0.0
    %873 = vmatprep.subr.mxu0 0.0
    %874 = vmatpush1.msra.mxu0 0.0
    %875 = vmatprep.subr.mxu0 0.0
    %876 = vmatpush1.msra.mxu0 0.0
    %877 = vmatprep.subr.mxu0 0.0
    %878 = vmatpush1.msra.mxu0 0.0
    %879 = vmatprep.subr.mxu0 0.0
    %880 = vmatpush1.msra.mxu0 0.0
    %881 = vmatprep.subr.mxu0 0.0
    %882 = vmatpush1.msra.mxu0 0.0
    %883 = vmatprep.subr.mxu0 0.0
    %884 = vmatpush1.msra.mxu0 0.0
    %885 = vmatprep.subr.mxu0 0.0
    %886 = vmatpush1.msra.mxu0 0.0
    %887 = vmatprep.subr.mxu0 0.0
    %888 = vmatpush1.msra.mxu0 0.0
    %889 = vmatprep.subr.mxu0 0.0
    %890 = vmatpush1.msra.mxu0 0.0
    %891 = vmatprep.subr.mxu0 0.0
    %892 = vmatpush1.msra.mxu0 0.0
    %893 = vmatprep.subr.mxu0 0.0
    %894 = vmatpush1.msra.mxu0 0.0
    %895 = vmatprep.subr.mxu0 0.0
    %896 = vmatpush1.msra.mxu0 0.0
    %897 = vmatprep.subr.mxu0 0.0
    %898 = vmatpush1.msra.mxu0 0.0
    %899 = vmatprep.subr.mxu0 0.0
    %900 = vmatpush1.msra.mxu0 0.0
    %901 = vmatprep.subr.mxu0 0.0
    %902 = vmatpush1.msra.mxu0 0.0
    %903 = vmatprep.subr.mxu0 0.0
    %904 = vmatpush1.msra.mxu0 0.0
    %905 = vmatprep.subr.mxu0 0.0
    %906 = vmatpush1.msra.mxu0 0.0
    %907 = vmatprep.subr.mxu0 0.0
    %908 = vmatpush1.msra.mxu0 0.0
    %909 = vmatprep.mubr.f32.mxu0 0.0
    %910 = vmatmul.mubr.f32.gmra.mrb[0].mxu0 %v831
    %v911 = vpop.f32.mrb[0].mxu0
    %v912 = vadd.f32 0.0, %v911
    %v913 = vpop.f32.mrb[0].mxu0
    %914 = vmatprep.mubr.f32.mxu0 0.0
    %915 = vmatmul.mubr.f32.gmra.mrb[0].mxu0 %v834
    %v916 = vpop.f32.mrb[0].mxu0
    %v917 = vadd.f32 0.0, %v916
    %v918 = vpop.f32.mrb[0].mxu0
    %919 = vmatprep.mubr.f32.mxu0 0.0
    %920 = vmatmul.mubr.f32.gmra.mrb[0].mxu0 %v837
    %v921 = vpop.f32.mrb[0].mxu0
    %v922 = vadd.f32 0.0, %v921
    %v923 = vpop.f32.mrb[0].mxu0
    %924 = vmatprep.mubr.f32.mxu0 0.0
    %925 = vmatmul.mubr.f32.gmra.mrb[0].mxu0 %v840
    %v926 = vpop.f32.mrb[0].mxu0
    %v927 = vadd.f32 0.0, %v926
    %v928 = vpop.f32.mrb[0].mxu0
    %929 = vmatprep.mubr.f32.mxu0 0.0
    %930 = vmatmul.mubr.f32.gmra.mrb[0].mxu0 %v843
    %v931 = vpop.f32.mrb[0].mxu0
    %v932 = vadd.f32 0.0, %v931
    %v933 = vpop.f32.mrb[0].mxu0
    %934 = vdwg.mxu0
    %935 = vst.msk [vmem:[#allocation2] sm:$0xff] %vm409, %v524
    %936 = vst.msk [vmem:[#allocation2 + $0x8] sm:$0xff] %vm409, %v525
    %937 = vst.msk [vmem:[#allocation2 + $0x10] sm:$0xff] %vm409, %v536
    %938 = vst.msk [vmem:[#allocation2 + $0x18] sm:$0xff] %vm409, %v537
    %939 = vst.msk [vmem:[#allocation2 + $0x20] sm:$0xff] %vm409, %v538
    %945 = vrot.lane.b32.xlu0 %v912, 32
    %v946 = vpop.permute.xlu0 %945
    %947 = vrot.lane.b32.xlu0 %v917, 32
    %v948 = vpop.permute.xlu0 %947
    %949 = vrot.lane.b32.xlu0 %v922, 32
    %v950 = vpop.permute.xlu0 %949
    %951 = vrot.lane.b32.xlu0 %v927, 32
    %v952 = vpop.permute.xlu0 %951
    %953 = vrot.lane.b32.xlu0 %v932, 32
    %v954 = vpop.permute.xlu0 %953
    %vm960 = vcmask 523520
    %961 = vst.msk [vmem:[#allocation2] sm:$0xff] %vm960, %v946
    %962 = vst.msk [vmem:[#allocation2 + $0x8] sm:$0xff] %vm960, %v948
    %963 = vst.msk [vmem:[#allocation2 + $0x10] sm:$0xff] %vm960, %v950
    %964 = vst.msk [vmem:[#allocation2 + $0x18] sm:$0xff] %vm960, %v952
    %965 = vst.msk [vmem:[#allocation2 + $0x20] sm:$0xff] %vm960, %v954
    %v966 = vld [vmem:[#allocation2] sm:$0xff]
    %v967 = vld [vmem:[#allocation2 + $0x8] sm:$0xff]
    %v968 = vld [vmem:[%s12] sm:$0xff]
    %v969 = vld [vmem:[%s12 + $0x8] sm:$0xff]
    %v970 = vld [vmem:[%s12 + $0x10] sm:$0xff]
    %v971 = vld [vmem:[%s12 + $0x18] sm:$0xff]
    %v972 = vld [vmem:[%s12 + $0x20] sm:$0xff]
    %v973 = vld [vmem:[%s12 + $0x28] sm:$0xff]
    %v974 = vld [vmem:[%s12 + $0x30] sm:$0xff]
    %v975 = vld [vmem:[%s12 + $0x38] sm:$0xff]
    %vm976 = vcmask 523264
    %v978 = vsel %vm976, %v966, 0
    %v981 = vsel %vm976, %v967, 0
    %983 = vmatprep.subr.mxu0 0.0
    %984 = vmatpush1.msra.mxu0 %v968
    %985 = vmatprep.subr.mxu0 0.0
    %986 = vmatpush1.msra.mxu0 %v969
    %987 = vmatprep.subr.mxu0 0.0
    %988 = vmatpush1.msra.mxu0 %v970
    %989 = vmatprep.subr.mxu0 0.0
    %990 = vmatpush1.msra.mxu0 %v971
    %991 = vmatprep.subr.mxu0 0.0
    %992 = vmatpush1.msra.mxu0 %v972
    %993 = vmatprep.subr.mxu0 0.0
    %994 = vmatpush1.msra.mxu0 %v973
    %995 = vmatprep.subr.mxu0 0.0
    %996 = vmatpush1.msra.mxu0 %v974
    %997 = vmatprep.subr.mxu0 0.0
    %998 = vmatpush1.msra.mxu0 %v975
    %999 = vmatprep.subr.mxu0 0.0
    %1000 = vmatpush1.msra.mxu0 0.0
    %1001 = vmatprep.subr.mxu0 0.0
    %1002 = vmatpush1.msra.mxu0 0.0
    %1003 = vmatprep.subr.mxu0 0.0
    %1004 = vmatpush1.msra.mxu0 0.0
    %1005 = vmatprep.subr.mxu0 0.0
    %1006 = vmatpush1.msra.mxu0 0.0
    %1007 = vmatprep.subr.mxu0 0.0
    %1008 = vmatpush1.msra.mxu0 0.0
    %1009 = vmatprep.subr.mxu0 0.0
    %1010 = vmatpush1.msra.mxu0 0.0
    %1011 = vmatprep.subr.mxu0 0.0
    %1012 = vmatpush1.msra.mxu0 0.0
    %1013 = vmatprep.subr.mxu0 0.0
    %1014 = vmatpush1.msra.mxu0 0.0
    %1015 = vmatprep.subr.mxu0 0.0
    %1016 = vmatpush1.msra.mxu0 0.0
    %1017 = vmatprep.subr.mxu0 0.0
    %1018 = vmatpush1.msra.mxu0 0.0
    %1019 = vmatprep.subr.mxu0 0.0
    %1020 = vmatpush1.msra.mxu0 0.0
    %1021 = vmatprep.subr.mxu0 0.0
    %1022 = vmatpush1.msra.mxu0 0.0
    %1023 = vmatprep.subr.mxu0 0.0
    %1024 = vmatpush1.msra.mxu0 0.0
    %1025 = vmatprep.subr.mxu0 0.0
    %1026 = vmatpush1.msra.mxu0 0.0
    %1027 = vmatprep.subr.mxu0 0.0
    %1028 = vmatpush1.msra.mxu0 0.0
    %1029 = vmatprep.subr.mxu0 0.0
    %1030 = vmatpush1.msra.mxu0 0.0
    %1031 = vmatprep.subr.mxu0 0.0
    %1032 = vmatpush1.msra.mxu0 0.0
    %1033 = vmatprep.subr.mxu0 0.0
    %1034 = vmatpush1.msra.mxu0 0.0
    %1035 = vmatprep.subr.mxu0 0.0
    %1036 = vmatpush1.msra.mxu0 0.0
    %1037 = vmatprep.subr.mxu0 0.0
    %1038 = vmatpush1.msra.mxu0 0.0
    %1039 = vmatprep.subr.mxu0 0.0
    %1040 = vmatpush1.msra.mxu0 0.0
    %1041 = vmatprep.subr.mxu0 0.0
    %1042 = vmatpush1.msra.mxu0 0.0
    %1043 = vmatprep.subr.mxu0 0.0
    %1044 = vmatpush1.msra.mxu0 0.0
    %1045 = vmatprep.subr.mxu0 0.0
    %1046 = vmatpush1.msra.mxu0 0.0
    %1047 = vmatprep.mubr.f32.mxu0 0.0
    %1048 = vmatmul.mubr.f32.gmra.mrb[0].mxu0 %v978
    %v1049 = vpop.f32.mrb[0].mxu0
    %v1050 = vadd.f32 0.0, %v1049
    %v1051 = vpop.f32.mrb[0].mxu0
    %1052 = vmatprep.mubr.f32.mxu0 0.0
    %1053 = vmatmul.mubr.f32.gmra.mrb[0].mxu0 %v981
    %v1054 = vpop.f32.mrb[0].mxu0
    %v1055 = vadd.f32 0.0, %v1054
    %v1056 = vpop.f32.mrb[0].mxu0
    %1057 = vdwg.mxu0
    %v1058 = vld [vmem:[#allocation2 + $0x10] sm:$0xff]
    %v1059 = vld [vmem:[#allocation2 + $0x18] sm:$0xff]
    %v1060 = vld [vmem:[#allocation2 + $0x20] sm:$0xff]
    %v1061 = vld [vmem:[%s13] sm:$0xff]
    %v1062 = vld [vmem:[%s13 + $0x8] sm:$0xff]
    %v1063 = vld [vmem:[%s13 + $0x10] sm:$0xff]
    %v1064 = vld [vmem:[%s13 + $0x18] sm:$0xff]
    %v1065 = vld [vmem:[%s13 + $0x20] sm:$0xff]
    %v1066 = vld [vmem:[%s13 + $0x28] sm:$0xff]
    %v1067 = vld [vmem:[%s13 + $0x30] sm:$0xff]
    %v1068 = vld [vmem:[%s13 + $0x38] sm:$0xff]
    %v1069 = vld [vmem:[%s14] sm:$0x1]
    %v1071 = vlaneseq
    %v1072 = vshrl.u32 %v1071, 7
    %v1073 = vsub.s32 0, %v1072
    %v1074 = vrot.slane %v1069, %v1073
    %v1077 = vsel %vm976, %v1058, 0
    %v1080 = vsel %vm976, %v1059, 0
    %v1083 = vsel %vm976, %v1060, 0
    %1085 = vmatprep.subr.mxu0 0.0
    %1086 = vmatpush1.msra.mxu0 %v1061
    %1087 = vmatprep.subr.mxu0 0.0
    %1088 = vmatpush1.msra.mxu0 %v1062
    %1089 = vmatprep.subr.mxu0 0.0
    %1090 = vmatpush1.msra.mxu0 %v1063
    %1091 = vmatprep.subr.mxu0 0.0
    %1092 = vmatpush1.msra.mxu0 %v1064
    %1093 = vmatprep.subr.mxu0 0.0
    %1094 = vmatpush1.msra.mxu0 %v1065
    %1095 = vmatprep.subr.mxu0 0.0
    %1096 = vmatpush1.msra.mxu0 %v1066
    %1097 = vmatprep.subr.mxu0 0.0
    %1098 = vmatpush1.msra.mxu0 %v1067
    %1099 = vmatprep.subr.mxu0 0.0
    %1100 = vmatpush1.msra.mxu0 %v1068
    %1101 = vmatprep.subr.mxu0 0.0
    %1102 = vmatpush1.msra.mxu0 0.0
    %1103 = vmatprep.subr.mxu0 0.0
    %1104 = vmatpush1.msra.mxu0 0.0
    %1105 = vmatprep.subr.mxu0 0.0
    %1106 = vmatpush1.msra.mxu0 0.0
    %1107 = vmatprep.subr.mxu0 0.0
    %1108 = vmatpush1.msra.mxu0 0.0
    %1109 = vmatprep.subr.mxu0 0.0
    %1110 = vmatpush1.msra.mxu0 0.0
    %1111 = vmatprep.subr.mxu0 0.0
    %1112 = vmatpush1.msra.mxu0 0.0
    %1113 = vmatprep.subr.mxu0 0.0
    %1114 = vmatpush1.msra.mxu0 0.0
    %1115 = vmatprep.subr.mxu0 0.0
    %1116 = vmatpush1.msra.mxu0 0.0
    %1117 = vmatprep.subr.mxu0 0.0
    %1118 = vmatpush1.msra.mxu0 0.0
    %1119 = vmatprep.subr.mxu0 0.0
    %1120 = vmatpush1.msra.mxu0 0.0
    %1121 = vmatprep.subr.mxu0 0.0
    %1122 = vmatpush1.msra.mxu0 0.0
    %1123 = vmatprep.subr.mxu0 0.0
    %1124 = vmatpush1.msra.mxu0 0.0
    %1125 = vmatprep.subr.mxu0 0.0
    %1126 = vmatpush1.msra.mxu0 0.0
    %1127 = vmatprep.subr.mxu0 0.0
    %1128 = vmatpush1.msra.mxu0 0.0
    %1129 = vmatprep.subr.mxu0 0.0
    %1130 = vmatpush1.msra.mxu0 0.0
    %1131 = vmatprep.subr.mxu0 0.0
    %1132 = vmatpush1.msra.mxu0 0.0
    %1133 = vmatprep.subr.mxu0 0.0
    %1134 = vmatpush1.msra.mxu0 0.0
    %1135 = vmatprep.subr.mxu0 0.0
    %1136 = vmatpush1.msra.mxu0 0.0
    %1137 = vmatprep.subr.mxu0 0.0
    %1138 = vmatpush1.msra.mxu0 0.0
    %1139 = vmatprep.subr.mxu0 0.0
    %1140 = vmatpush1.msra.mxu0 0.0
    %1141 = vmatprep.subr.mxu0 0.0
    %1142 = vmatpush1.msra.mxu0 0.0
    %1143 = vmatprep.subr.mxu0 0.0
    %1144 = vmatpush1.msra.mxu0 0.0
    %1145 = vmatprep.subr.mxu0 0.0
    %1146 = vmatpush1.msra.mxu0 0.0
    %1147 = vmatprep.subr.mxu0 0.0
    %1148 = vmatpush1.msra.mxu0 0.0
    %1149 = vmatprep.mubr.f32.mxu0 0.0
    %1150 = vmatmul.mubr.f32.gmra.mrb[0].mxu0 %v1077
    %v1151 = vpop.f32.mrb[0].mxu0
    %v1152 = vadd.f32 %v1074, %v1151
    %v1153 = vpop.f32.mrb[0].mxu0
    %1154 = vmatprep.mubr.f32.mxu0 0.0
    %1155 = vmatmul.mubr.f32.gmra.mrb[0].mxu0 %v1080
    %v1156 = vpop.f32.mrb[0].mxu0
    %v1157 = vadd.f32 %v1074, %v1156
    %v1158 = vpop.f32.mrb[0].mxu0
    %1159 = vmatprep.mubr.f32.mxu0 0.0
    %1160 = vmatmul.mubr.f32.gmra.mrb[0].mxu0 %v1083
    %v1161 = vpop.f32.mrb[0].mxu0
    %v1162 = vadd.f32 %v1074, %v1161
    %v1163 = vpop.f32.mrb[0].mxu0
    %1164 = vdwg.mxu0
    %v1167 = vcombine.high %v1050, %v1050
    %v1169 = vunpack.c.l.s4 1966171168
    %v1170 = vunpack.c.0.s8 %v1169
    %v1171 = vlaneseq
    %v1172 = vshrl.u32 %v1171, 7
    %v1173 = vsub.s32 %v1170, %v1172
    %v1174 = vrot.slane %v1050, %v1173
    %v1176 = vunpack.c.l.s4 1966171168
    %v1177 = vunpack.c.0.s8 %v1176
    %v1178 = vlaneseq
    %v1179 = vshrl.u32 %v1178, 7
    %v1180 = vsub.s32 %v1177, %v1179
    %v1181 = vrot.slane %v1167, %v1180
    %v1182 = vcombine.high %v1174, %v1174
    %v1183 = vcombine.high %v1181, %v1181
    %v1185 = vunpack.c.l.s4 1966171168
    %v1186 = vunpack.c.0.s8 %v1185
    %v1187 = vlaneseq
    %v1188 = vshrl.u32 %v1187, 7
    %v1189 = vsub.s32 %v1186, %v1188
    %v1190 = vrot.slane %v1174, %v1189
    %v1192 = vunpack.c.l.s4 1966171168
    %v1193 = vunpack.c.0.s8 %v1192
    %v1194 = vlaneseq
    %v1195 = vshrl.u32 %v1194, 7
    %v1196 = vsub.s32 %v1193, %v1195
    %v1197 = vrot.slane %v1181, %v1196
    %v1199 = vunpack.c.l.s4 1966171168
    %v1200 = vunpack.c.0.s8 %v1199
    %v1201 = vlaneseq
    %v1202 = vshrl.u32 %v1201, 7
    %v1203 = vsub.s32 %v1200, %v1202
    %v1204 = vrot.slane %v1182, %v1203
    %v1206 = vunpack.c.l.s4 1966171168
    %v1207 = vunpack.c.0.s8 %v1206
    %v1208 = vlaneseq
    %v1209 = vshrl.u32 %v1208, 7
    %v1210 = vsub.s32 %v1207, %v1209
    %v1211 = vrot.slane %v1183, %v1210
    %v1212 = vcombine.high %v1190, %v1190
    %v1213 = vcombine.high %v1197, %v1197
    %v1214 = vcombine.high %v1204, %v1204
    %v1215 = vcombine.high %v1211, %v1211
    %v1216 = vcombine.high %v1055, %v1055
    %v1218 = vunpack.c.l.s4 1966171168
    %v1219 = vunpack.c.0.s8 %v1218
    %v1220 = vlaneseq
    %v1221 = vshrl.u32 %v1220, 7
    %v1222 = vsub.s32 %v1219, %v1221
    %v1223 = vrot.slane %v1055, %v1222
    %v1225 = vunpack.c.l.s4 1966171168
    %v1226 = vunpack.c.0.s8 %v1225
    %v1227 = vlaneseq
    %v1228 = vshrl.u32 %v1227, 7
    %v1229 = vsub.s32 %v1226, %v1228
    %v1230 = vrot.slane %v1216, %v1229
    %v1231 = vcombine.high %v1223, %v1223
    %v1232 = vcombine.high %v1230, %v1230
    %v1234 = vunpack.c.l.s4 1966171168
    %v1235 = vunpack.c.0.s8 %v1234
    %v1236 = vlaneseq
    %v1237 = vshrl.u32 %v1236, 7
    %v1238 = vsub.s32 %v1235, %v1237
    %v1239 = vrot.slane %v1223, %v1238
    %v1241 = vunpack.c.l.s4 1966171168
    %v1242 = vunpack.c.0.s8 %v1241
    %v1243 = vlaneseq
    %v1244 = vshrl.u32 %v1243, 7
    %v1245 = vsub.s32 %v1242, %v1244
    %v1246 = vrot.slane %v1230, %v1245
    %v1248 = vunpack.c.l.s4 1966171168
    %v1249 = vunpack.c.0.s8 %v1248
    %v1250 = vlaneseq
    %v1251 = vshrl.u32 %v1250, 7
    %v1252 = vsub.s32 %v1249, %v1251
    %v1253 = vrot.slane %v1231, %v1252
    %v1255 = vunpack.c.l.s4 1966171168
    %v1256 = vunpack.c.0.s8 %v1255
    %v1257 = vlaneseq
    %v1258 = vshrl.u32 %v1257, 7
    %v1259 = vsub.s32 %v1256, %v1258
    %v1260 = vrot.slane %v1232, %v1259
    %v1261 = vcombine.high %v1239, %v1239
    %v1262 = vcombine.high %v1246, %v1246
    %v1263 = vcombine.high %v1253, %v1253
    %v1264 = vcombine.high %v1260, %v1260
    %v1265 = vlaneseq
    %v1266 = vshrl.u32 %v1265, 7
    %v1267 = vsub.s32 0, %v1266
    %v1268 = vrot.slane %v1190, %v1267
    %v1269 = vlaneseq
    %v1270 = vshrl.u32 %v1269, 7
    %v1271 = vsub.s32 0, %v1270
    %v1272 = vrot.slane %v1204, %v1271
    %v1273 = vlaneseq
    %v1274 = vshrl.u32 %v1273, 7
    %v1275 = vsub.s32 0, %v1274
    %v1276 = vrot.slane %v1212, %v1275
    %v1277 = vlaneseq
    %v1278 = vshrl.u32 %v1277, 7
    %v1279 = vsub.s32 0, %v1278
    %v1280 = vrot.slane %v1214, %v1279
    %v1281 = vlaneseq
    %v1282 = vshrl.u32 %v1281, 7
    %v1283 = vsub.s32 0, %v1282
    %v1284 = vrot.slane %v1197, %v1283
    %v1285 = vlaneseq
    %v1286 = vshrl.u32 %v1285, 7
    %v1287 = vsub.s32 0, %v1286
    %v1288 = vrot.slane %v1211, %v1287
    %v1289 = vlaneseq
    %v1290 = vshrl.u32 %v1289, 7
    %v1291 = vsub.s32 0, %v1290
    %v1292 = vrot.slane %v1213, %v1291
    %v1293 = vlaneseq
    %v1294 = vshrl.u32 %v1293, 7
    %v1295 = vsub.s32 0, %v1294
    %v1296 = vrot.slane %v1215, %v1295
    %v1297 = vlaneseq
    %v1298 = vshrl.u32 %v1297, 7
    %v1299 = vsub.s32 0, %v1298
    %v1300 = vrot.slane %v1239, %v1299
    %v1301 = vlaneseq
    %v1302 = vshrl.u32 %v1301, 7
    %v1303 = vsub.s32 0, %v1302
    %v1304 = vrot.slane %v1253, %v1303
    %v1305 = vlaneseq
    %v1306 = vshrl.u32 %v1305, 7
    %v1307 = vsub.s32 0, %v1306
    %v1308 = vrot.slane %v1261, %v1307
    %v1309 = vlaneseq
    %v1310 = vshrl.u32 %v1309, 7
    %v1311 = vsub.s32 0, %v1310
    %v1312 = vrot.slane %v1263, %v1311
    %v1313 = vlaneseq
    %v1314 = vshrl.u32 %v1313, 7
    %v1315 = vsub.s32 0, %v1314
    %v1316 = vrot.slane %v1246, %v1315
    %v1317 = vlaneseq
    %v1318 = vshrl.u32 %v1317, 7
    %v1319 = vsub.s32 0, %v1318
    %v1320 = vrot.slane %v1260, %v1319
    %v1321 = vlaneseq
    %v1322 = vshrl.u32 %v1321, 7
    %v1323 = vsub.s32 0, %v1322
    %v1324 = vrot.slane %v1262, %v1323
    %v1325 = vlaneseq
    %v1326 = vshrl.u32 %v1325, 7
    %v1327 = vsub.s32 0, %v1326
    %v1328 = vrot.slane %v1264, %v1327
    %v1345 = vadd.f32 %v1268, %v1152
    %v1346 = vadd.f32 %v1268, %v1157
    %v1347 = vadd.f32 %v1268, %v1162
    %v1348 = vadd.f32 %v1272, %v1152
    %v1349 = vadd.f32 %v1272, %v1157
    %v1350 = vadd.f32 %v1272, %v1162
    %v1351 = vadd.f32 %v1276, %v1152
    %v1352 = vadd.f32 %v1276, %v1157
    %v1353 = vadd.f32 %v1276, %v1162
    %v1354 = vadd.f32 %v1280, %v1152
    %v1355 = vadd.f32 %v1280, %v1157
    %v1356 = vadd.f32 %v1280, %v1162
    %v1357 = vadd.f32 %v1284, %v1152
    %v1358 = vadd.f32 %v1284, %v1157
    %v1359 = vadd.f32 %v1284, %v1162
    %v1360 = vadd.f32 %v1288, %v1152
    %v1361 = vadd.f32 %v1288, %v1157
    %v1362 = vadd.f32 %v1288, %v1162
    %v1363 = vadd.f32 %v1292, %v1152
    %v1364 = vadd.f32 %v1292, %v1157
    %v1365 = vadd.f32 %v1292, %v1162
    %v1366 = vadd.f32 %v1296, %v1152
    %v1367 = vadd.f32 %v1296, %v1157
    %v1368 = vadd.f32 %v1296, %v1162
    %v1369 = vadd.f32 %v1300, %v1152
    %v1370 = vadd.f32 %v1300, %v1157
    %v1371 = vadd.f32 %v1300, %v1162
    %v1372 = vadd.f32 %v1304, %v1152
    %v1373 = vadd.f32 %v1304, %v1157
    %v1374 = vadd.f32 %v1304, %v1162
    %v1375 = vadd.f32 %v1308, %v1152
    %v1376 = vadd.f32 %v1308, %v1157
    %v1377 = vadd.f32 %v1308, %v1162
    %v1378 = vadd.f32 %v1312, %v1152
    %v1379 = vadd.f32 %v1312, %v1157
    %v1380 = vadd.f32 %v1312, %v1162
    %v1381 = vadd.f32 %v1316, %v1152
    %v1382 = vadd.f32 %v1316, %v1157
    %v1383 = vadd.f32 %v1316, %v1162
    %v1384 = vadd.f32 %v1320, %v1152
    %v1385 = vadd.f32 %v1320, %v1157
    %v1386 = vadd.f32 %v1320, %v1162
    %v1387 = vadd.f32 %v1324, %v1152
    %v1388 = vadd.f32 %v1324, %v1157
    %v1389 = vadd.f32 %v1324, %v1162
    %v1390 = vadd.f32 %v1328, %v1152
    %v1391 = vadd.f32 %v1328, %v1157
    %v1392 = vadd.f32 %v1328, %v1162
    %v1393 = vmax.f32 %v1345, 0.0
    %v1394 = vmax.f32 %v1346, 0.0
    %v1395 = vmax.f32 %v1347, 0.0
    %v1396 = vmax.f32 %v1348, 0.0
    %v1397 = vmax.f32 %v1349, 0.0
    %v1398 = vmax.f32 %v1350, 0.0
    %v1399 = vmax.f32 %v1351, 0.0
    %v1400 = vmax.f32 %v1352, 0.0
    %v1401 = vmax.f32 %v1353, 0.0
    %v1402 = vmax.f32 %v1354, 0.0
    %v1403 = vmax.f32 %v1355, 0.0
    %v1404 = vmax.f32 %v1356, 0.0
    %v1405 = vmax.f32 %v1357, 0.0
    %v1406 = vmax.f32 %v1358, 0.0
    %v1407 = vmax.f32 %v1359, 0.0
    %v1408 = vmax.f32 %v1360, 0.0
    %v1409 = vmax.f32 %v1361, 0.0
    %v1410 = vmax.f32 %v1362, 0.0
    %v1411 = vmax.f32 %v1363, 0.0
    %v1412 = vmax.f32 %v1364, 0.0
    %v1413 = vmax.f32 %v1365, 0.0
    %v1414 = vmax.f32 %v1366, 0.0
    %v1415 = vmax.f32 %v1367, 0.0
    %v1416 = vmax.f32 %v1368, 0.0
    %v1417 = vmax.f32 %v1369, 0.0
    %v1418 = vmax.f32 %v1370, 0.0
    %v1419 = vmax.f32 %v1371, 0.0
    %v1420 = vmax.f32 %v1372, 0.0
    %v1421 = vmax.f32 %v1373, 0.0
    %v1422 = vmax.f32 %v1374, 0.0
    %v1423 = vmax.f32 %v1375, 0.0
    %v1424 = vmax.f32 %v1376, 0.0
    %v1425 = vmax.f32 %v1377, 0.0
    %v1426 = vmax.f32 %v1378, 0.0
    %v1427 = vmax.f32 %v1379, 0.0
    %v1428 = vmax.f32 %v1380, 0.0
    %v1429 = vmax.f32 %v1381, 0.0
    %v1430 = vmax.f32 %v1382, 0.0
    %v1431 = vmax.f32 %v1383, 0.0
    %v1432 = vmax.f32 %v1384, 0.0
    %v1433 = vmax.f32 %v1385, 0.0
    %v1434 = vmax.f32 %v1386, 0.0
    %v1435 = vmax.f32 %v1387, 0.0
    %v1436 = vmax.f32 %v1388, 0.0
    %v1437 = vmax.f32 %v1389, 0.0
    %v1438 = vmax.f32 %v1390, 0.0
    %v1439 = vmax.f32 %v1391, 0.0
    %v1440 = vmax.f32 %v1392, 0.0
    %v1441 = vpack.c.bf16 %v1394, %v1393
    %v1442 = vpack.c.bf16 %v1396, %v1395
    %v1443 = vpack.c.bf16 %v1398, %v1397
    %v1444 = vpack.c.bf16 %v1400, %v1399
    %v1445 = vpack.c.bf16 %v1402, %v1401
    %v1446 = vpack.c.bf16 %v1404, %v1403
    %v1447 = vpack.c.bf16 %v1406, %v1405
    %v1448 = vpack.c.bf16 %v1408, %v1407
    %v1449 = vpack.c.bf16 %v1410, %v1409
    %v1450 = vpack.c.bf16 %v1412, %v1411
    %v1451 = vpack.c.bf16 %v1414, %v1413
    %v1452 = vpack.c.bf16 %v1416, %v1415
    %v1453 = vpack.c.bf16 %v1418, %v1417
    %v1454 = vpack.c.bf16 %v1420, %v1419
    %v1455 = vpack.c.bf16 %v1422, %v1421
    %v1456 = vpack.c.bf16 %v1424, %v1423
    %v1457 = vpack.c.bf16 %v1426, %v1425
    %v1458 = vpack.c.bf16 %v1428, %v1427
    %v1459 = vpack.c.bf16 %v1430, %v1429
    %v1460 = vpack.c.bf16 %v1432, %v1431
    %v1461 = vpack.c.bf16 %v1434, %v1433
    %v1462 = vpack.c.bf16 %v1436, %v1435
    %v1463 = vpack.c.bf16 %v1438, %v1437
    %v1464 = vpack.c.bf16 %v1440, %v1439
    %v1465 = vld [vmem:[%s15] sm:$0xf]
    %v1466 = vld [vmem:[%s15 + $0x4] sm:$0xf]
    %v1467 = vld [vmem:[%s15 + $0x8] sm:$0xf]
    %v1468 = vld [vmem:[%s15 + $0xc] sm:$0xf]
    %v1469 = vld [vmem:[%s16] sm:$0x1]
    %v1471 = vlaneseq
    %v1472 = vshrl.u32 %v1471, 7
    %v1473 = vsub.s32 0, %v1472
    %v1474 = vrot.slane %v1469, %v1473
    %v1480 = vunpack.c.l.b16 %v1465
    %v1481 = vunpack.c.l.b16 %v1466
    %v1482 = vunpack.c.l.b16 %v1467
    %v1483 = vunpack.c.l.b16 %v1468
    %v1484 = vpack.c.b16 %v1481, %v1480
    %v1485 = vpack.c.b16 %v1483, %v1482
    %v1489 = vsel %vm409, %v1441, 0
    %v1492 = vsel %vm409, %v1442, 0
    %v1495 = vsel %vm409, %v1443, 0
    %v1498 = vsel %vm409, %v1444, 0
    %v1501 = vsel %vm409, %v1445, 0
    %v1504 = vsel %vm409, %v1446, 0
    %v1507 = vsel %vm409, %v1447, 0
    %v1510 = vsel %vm409, %v1448, 0
    %v1513 = vsel %vm409, %v1449, 0
    %v1516 = vsel %vm409, %v1450, 0
    %v1519 = vsel %vm409, %v1451, 0
    %v1522 = vsel %vm409, %v1452, 0
    %v1525 = vsel %vm409, %v1453, 0
    %v1528 = vsel %vm409, %v1454, 0
    %v1531 = vsel %vm409, %v1455, 0
    %v1534 = vsel %vm409, %v1456, 0
    %v1537 = vsel %vm409, %v1457, 0
    %v1540 = vsel %vm409, %v1458, 0
    %v1543 = vsel %vm409, %v1459, 0
    %v1546 = vsel %vm409, %v1460, 0
    %v1549 = vsel %vm409, %v1461, 0
    %v1552 = vsel %vm409, %v1462, 0
    %v1555 = vsel %vm409, %v1463, 0
    %v1558 = vsel %vm409, %v1464, 0
    %1560 = vmatprep.subr.bf16.mxu0 0
    %1561 = vmatpush1.bf16.msra.mxu0 %v1484
    %1562 = vmatprep.subr.bf16.mxu0 0
    %1563 = vmatpush1.bf16.msra.mxu0 %v1485
    %1564 = vmatprep.subr.bf16.mxu0 0
    %1565 = vmatpush1.bf16.msra.mxu0 0
    %1566 = vmatprep.subr.bf16.mxu0 0
    %1567 = vmatpush1.bf16.msra.mxu0 0
    %1568 = vmatprep.subr.bf16.mxu0 0
    %1569 = vmatpush1.bf16.msra.mxu0 0
    %1570 = vmatprep.subr.bf16.mxu0 0
    %1571 = vmatpush1.bf16.msra.mxu0 0
    %1572 = vmatprep.subr.bf16.mxu0 0
    %1573 = vmatpush1.bf16.msra.mxu0 0
    %1574 = vmatprep.subr.bf16.mxu0 0
    %1575 = vmatpush1.bf16.msra.mxu0 0
    %1576 = vmatprep.subr.bf16.mxu0 0
    %1577 = vmatpush1.bf16.msra.mxu0 0
    %1578 = vmatprep.subr.bf16.mxu0 0
    %1579 = vmatpush1.bf16.msra.mxu0 0
    %1580 = vmatprep.subr.bf16.mxu0 0
    %1581 = vmatpush1.bf16.msra.mxu0 0
    %1582 = vmatprep.subr.bf16.mxu0 0
    %1583 = vmatpush1.bf16.msra.mxu0 0
    %1584 = vmatprep.subr.bf16.mxu0 0
    %1585 = vmatpush1.bf16.msra.mxu0 0
    %1586 = vmatprep.subr.bf16.mxu0 0
    %1587 = vmatpush1.bf16.msra.mxu0 0
    %1588 = vmatprep.subr.bf16.mxu0 0
    %1589 = vmatpush1.bf16.msra.mxu0 0
    %1590 = vmatprep.subr.bf16.mxu0 0
    %1591 = vmatpush1.bf16.msra.mxu0 0
    %1592 = vmatprep.mubr.bf16.mxu0 0
    %1593 = vmatmul.mubr.bf16.gmra.mrb[0].mxu0 %v1489
    %v1594 = vpop.f32.mrb[0].mxu0
    %v1595 = vadd.f32 %v1474, %v1594
    %v1596 = vpop.f32.mrb[0].mxu0
    %v1597 = vpop.f32.mrb[0].mxu0
    %v1598 = vadd.f32 %v1474, %v1597
    %v1599 = vpop.f32.mrb[0].mxu0
    %1600 = vmatprep.mubr.bf16.mxu0 0
    %1601 = vmatmul.mubr.bf16.gmra.mrb[0].mxu0 %v1492
    %v1602 = vpop.f32.mrb[0].mxu0
    %v1603 = vadd.f32 %v1474, %v1602
    %v1604 = vpop.f32.mrb[0].mxu0
    %v1605 = vpop.f32.mrb[0].mxu0
    %v1606 = vadd.f32 %v1474, %v1605
    %v1607 = vpop.f32.mrb[0].mxu0
    %1608 = vmatprep.mubr.bf16.mxu0 0
    %1609 = vmatmul.mubr.bf16.gmra.mrb[0].mxu0 %v1495
    %v1610 = vpop.f32.mrb[0].mxu0
    %v1611 = vadd.f32 %v1474, %v1610
    %v1612 = vpop.f32.mrb[0].mxu0
    %v1613 = vpop.f32.mrb[0].mxu0
    %v1614 = vadd.f32 %v1474, %v1613
    %v1615 = vpop.f32.mrb[0].mxu0
    %1616 = vmatprep.mubr.bf16.mxu0 0
    %1617 = vmatmul.mubr.bf16.gmra.mrb[0].mxu0 %v1498
    %v1618 = vpop.f32.mrb[0].mxu0
    %v1619 = vadd.f32 %v1474, %v1618
    %v1620 = vpop.f32.mrb[0].mxu0
    %v1621 = vpop.f32.mrb[0].mxu0
    %v1622 = vadd.f32 %v1474, %v1621
    %v1623 = vpop.f32.mrb[0].mxu0
    %1624 = vmatprep.mubr.bf16.mxu0 0
    %1625 = vmatmul.mubr.bf16.gmra.mrb[0].mxu0 %v1501
    %v1626 = vpop.f32.mrb[0].mxu0
    %v1627 = vadd.f32 %v1474, %v1626
    %v1628 = vpop.f32.mrb[0].mxu0
    %v1629 = vpop.f32.mrb[0].mxu0
    %v1630 = vadd.f32 %v1474, %v1629
    %v1631 = vpop.f32.mrb[0].mxu0
    %1632 = vmatprep.mubr.bf16.mxu0 0
    %1633 = vmatmul.mubr.bf16.gmra.mrb[0].mxu0 %v1504
    %v1634 = vpop.f32.mrb[0].mxu0
    %v1635 = vadd.f32 %v1474, %v1634
    %v1636 = vpop.f32.mrb[0].mxu0
    %v1637 = vpop.f32.mrb[0].mxu0
    %v1638 = vadd.f32 %v1474, %v1637
    %v1639 = vpop.f32.mrb[0].mxu0
    %1640 = vmatprep.mubr.bf16.mxu0 0
    %1641 = vmatmul.mubr.bf16.gmra.mrb[0].mxu0 %v1507
    %v1642 = vpop.f32.mrb[0].mxu0
    %v1643 = vadd.f32 %v1474, %v1642
    %v1644 = vpop.f32.mrb[0].mxu0
    %v1645 = vpop.f32.mrb[0].mxu0
    %v1646 = vadd.f32 %v1474, %v1645
    %v1647 = vpop.f32.mrb[0].mxu0
    %1648 = vmatprep.mubr.bf16.mxu0 0
    %1649 = vmatmul.mubr.bf16.gmra.mrb[0].mxu0 %v1510
    %v1650 = vpop.f32.mrb[0].mxu0
    %v1651 = vadd.f32 %v1474, %v1650
    %v1652 = vpop.f32.mrb[0].mxu0
    %v1653 = vpop.f32.mrb[0].mxu0
    %v1654 = vadd.f32 %v1474, %v1653
    %v1655 = vpop.f32.mrb[0].mxu0
    %1656 = vmatprep.mubr.bf16.mxu0 0
    %1657 = vmatmul.mubr.bf16.gmra.mrb[0].mxu0 %v1513
    %v1658 = vpop.f32.mrb[0].mxu0
    %v1659 = vadd.f32 %v1474, %v1658
    %v1660 = vpop.f32.mrb[0].mxu0
    %v1661 = vpop.f32.mrb[0].mxu0
    %v1662 = vadd.f32 %v1474, %v1661
    %v1663 = vpop.f32.mrb[0].mxu0
    %1664 = vmatprep.mubr.bf16.mxu0 0
    %1665 = vmatmul.mubr.bf16.gmra.mrb[0].mxu0 %v1516
    %v1666 = vpop.f32.mrb[0].mxu0
    %v1667 = vadd.f32 %v1474, %v1666
    %v1668 = vpop.f32.mrb[0].mxu0
    %v1669 = vpop.f32.mrb[0].mxu0
    %v1670 = vadd.f32 %v1474, %v1669
    %v1671 = vpop.f32.mrb[0].mxu0
    %1672 = vmatprep.mubr.bf16.mxu0 0
    %1673 = vmatmul.mubr.bf16.gmra.mrb[0].mxu0 %v1519
    %v1674 = vpop.f32.mrb[0].mxu0
    %v1675 = vadd.f32 %v1474, %v1674
    %v1676 = vpop.f32.mrb[0].mxu0
    %v1677 = vpop.f32.mrb[0].mxu0
    %v1678 = vadd.f32 %v1474, %v1677
    %v1679 = vpop.f32.mrb[0].mxu0
    %1680 = vmatprep.mubr.bf16.mxu0 0
    %1681 = vmatmul.mubr.bf16.gmra.mrb[0].mxu0 %v1522
    %v1682 = vpop.f32.mrb[0].mxu0
    %v1683 = vadd.f32 %v1474, %v1682
    %v1684 = vpop.f32.mrb[0].mxu0
    %v1685 = vpop.f32.mrb[0].mxu0
    %v1686 = vadd.f32 %v1474, %v1685
    %v1687 = vpop.f32.mrb[0].mxu0
    %1688 = vmatprep.mubr.bf16.mxu0 0
    %1689 = vmatmul.mubr.bf16.gmra.mrb[0].mxu0 %v1525
    %v1690 = vpop.f32.mrb[0].mxu0
    %v1691 = vadd.f32 %v1474, %v1690
    %v1692 = vpop.f32.mrb[0].mxu0
    %v1693 = vpop.f32.mrb[0].mxu0
    %v1694 = vadd.f32 %v1474, %v1693
    %v1695 = vpop.f32.mrb[0].mxu0
    %1696 = vmatprep.mubr.bf16.mxu0 0
    %1697 = vmatmul.mubr.bf16.gmra.mrb[0].mxu0 %v1528
    %v1698 = vpop.f32.mrb[0].mxu0
    %v1699 = vadd.f32 %v1474, %v1698
    %v1700 = vpop.f32.mrb[0].mxu0
    %v1701 = vpop.f32.mrb[0].mxu0
    %v1702 = vadd.f32 %v1474, %v1701
    %v1703 = vpop.f32.mrb[0].mxu0
    %1704 = vmatprep.mubr.bf16.mxu0 0
    %1705 = vmatmul.mubr.bf16.gmra.mrb[0].mxu0 %v1531
    %v1706 = vpop.f32.mrb[0].mxu0
    %v1707 = vadd.f32 %v1474, %v1706
    %v1708 = vpop.f32.mrb[0].mxu0
    %v1709 = vpop.f32.mrb[0].mxu0
    %v1710 = vadd.f32 %v1474, %v1709
    %v1711 = vpop.f32.mrb[0].mxu0
    %1712 = vmatprep.mubr.bf16.mxu0 0
    %1713 = vmatmul.mubr.bf16.gmra.mrb[0].mxu0 %v1534
    %v1714 = vpop.f32.mrb[0].mxu0
    %v1715 = vadd.f32 %v1474, %v1714
    %v1716 = vpop.f32.mrb[0].mxu0
    %v1717 = vpop.f32.mrb[0].mxu0
    %v1718 = vadd.f32 %v1474, %v1717
    %v1719 = vpop.f32.mrb[0].mxu0
    %1720 = vmatprep.mubr.bf16.mxu0 0
    %1721 = vmatmul.mubr.bf16.gmra.mrb[0].mxu0 %v1537
    %v1722 = vpop.f32.mrb[0].mxu0
    %v1723 = vadd.f32 %v1474, %v1722
    %v1724 = vpop.f32.mrb[0].mxu0
    %v1725 = vpop.f32.mrb[0].mxu0
    %v1726 = vadd.f32 %v1474, %v1725
    %v1727 = vpop.f32.mrb[0].mxu0
    %1728 = vmatprep.mubr.bf16.mxu0 0
    %1729 = vmatmul.mubr.bf16.gmra.mrb[0].mxu0 %v1540
    %v1730 = vpop.f32.mrb[0].mxu0
    %v1731 = vadd.f32 %v1474, %v1730
    %v1732 = vpop.f32.mrb[0].mxu0
    %v1733 = vpop.f32.mrb[0].mxu0
    %v1734 = vadd.f32 %v1474, %v1733
    %v1735 = vpop.f32.mrb[0].mxu0
    %1736 = vmatprep.mubr.bf16.mxu0 0
    %1737 = vmatmul.mubr.bf16.gmra.mrb[0].mxu0 %v1543
    %v1738 = vpop.f32.mrb[0].mxu0
    %v1739 = vadd.f32 %v1474, %v1738
    %v1740 = vpop.f32.mrb[0].mxu0
    %v1741 = vpop.f32.mrb[0].mxu0
    %v1742 = vadd.f32 %v1474, %v1741
    %v1743 = vpop.f32.mrb[0].mxu0
    %1744 = vmatprep.mubr.bf16.mxu0 0
    %1745 = vmatmul.mubr.bf16.gmra.mrb[0].mxu0 %v1546
    %v1746 = vpop.f32.mrb[0].mxu0
    %v1747 = vadd.f32 %v1474, %v1746
    %v1748 = vpop.f32.mrb[0].mxu0
    %v1749 = vpop.f32.mrb[0].mxu0
    %v1750 = vadd.f32 %v1474, %v1749
    %v1751 = vpop.f32.mrb[0].mxu0
    %1752 = vmatprep.mubr.bf16.mxu0 0
    %1753 = vmatmul.mubr.bf16.gmra.mrb[0].mxu0 %v1549
    %v1754 = vpop.f32.mrb[0].mxu0
    %v1755 = vadd.f32 %v1474, %v1754
    %v1756 = vpop.f32.mrb[0].mxu0
    %v1757 = vpop.f32.mrb[0].mxu0
    %v1758 = vadd.f32 %v1474, %v1757
    %v1759 = vpop.f32.mrb[0].mxu0
    %1760 = vmatprep.mubr.bf16.mxu0 0
    %1761 = vmatmul.mubr.bf16.gmra.mrb[0].mxu0 %v1552
    %v1762 = vpop.f32.mrb[0].mxu0
    %v1763 = vadd.f32 %v1474, %v1762
    %v1764 = vpop.f32.mrb[0].mxu0
    %v1765 = vpop.f32.mrb[0].mxu0
    %v1766 = vadd.f32 %v1474, %v1765
    %v1767 = vpop.f32.mrb[0].mxu0
    %1768 = vmatprep.mubr.bf16.mxu0 0
    %1769 = vmatmul.mubr.bf16.gmra.mrb[0].mxu0 %v1555
    %v1770 = vpop.f32.mrb[0].mxu0
    %v1771 = vadd.f32 %v1474, %v1770
    %v1772 = vpop.f32.mrb[0].mxu0
    %v1773 = vpop.f32.mrb[0].mxu0
    %v1774 = vadd.f32 %v1474, %v1773
    %v1775 = vpop.f32.mrb[0].mxu0
    %1776 = vmatprep.mubr.bf16.mxu0 0
    %1777 = vmatmul.mubr.bf16.gmra.mrb[0].mxu0 %v1558
    %v1778 = vpop.f32.mrb[0].mxu0
    %v1779 = vadd.f32 %v1474, %v1778
    %v1780 = vpop.f32.mrb[0].mxu0
    %v1781 = vpop.f32.mrb[0].mxu0
    %v1782 = vadd.f32 %v1474, %v1781
    %v1783 = vpop.f32.mrb[0].mxu0
    %1784 = vdwg.mxu0
    %v1785 = vmax.f32 %v1595, 0.0
    %v1786 = vmax.f32 %v1598, 0.0
    %v1787 = vmax.f32 %v1603, 0.0
    %v1788 = vmax.f32 %v1606, 0.0
    %v1789 = vmax.f32 %v1611, 0.0
    %v1790 = vmax.f32 %v1614, 0.0
    %v1791 = vmax.f32 %v1619, 0.0
    %v1792 = vmax.f32 %v1622, 0.0
    %v1793 = vmax.f32 %v1627, 0.0
    %v1794 = vmax.f32 %v1630, 0.0
    %v1795 = vmax.f32 %v1635, 0.0
    %v1796 = vmax.f32 %v1638, 0.0
    %v1797 = vmax.f32 %v1643, 0.0
    %v1798 = vmax.f32 %v1646, 0.0
    %v1799 = vmax.f32 %v1651, 0.0
    %v1800 = vmax.f32 %v1654, 0.0
    %v1801 = vmax.f32 %v1659, 0.0
    %v1802 = vmax.f32 %v1662, 0.0
    %v1803 = vmax.f32 %v1667, 0.0
    %v1804 = vmax.f32 %v1670, 0.0
    %v1805 = vmax.f32 %v1675, 0.0
    %v1806 = vmax.f32 %v1678, 0.0
    %v1807 = vmax.f32 %v1683, 0.0
    %v1808 = vmax.f32 %v1686, 0.0
    %v1809 = vmax.f32 %v1691, 0.0
    %v1810 = vmax.f32 %v1694, 0.0
    %v1811 = vmax.f32 %v1699, 0.0
    %v1812 = vmax.f32 %v1702, 0.0
    %v1813 = vmax.f32 %v1707, 0.0
    %v1814 = vmax.f32 %v1710, 0.0
    %v1815 = vmax.f32 %v1715, 0.0
    %v1816 = vmax.f32 %v1718, 0.0
    %v1817 = vmax.f32 %v1723, 0.0
    %v1818 = vmax.f32 %v1726, 0.0
    %v1819 = vmax.f32 %v1731, 0.0
    %v1820 = vmax.f32 %v1734, 0.0
    %v1821 = vmax.f32 %v1739, 0.0
    %v1822 = vmax.f32 %v1742, 0.0
    %v1823 = vmax.f32 %v1747, 0.0
    %v1824 = vmax.f32 %v1750, 0.0
    %v1825 = vmax.f32 %v1755, 0.0
    %v1826 = vmax.f32 %v1758, 0.0
    %v1827 = vmax.f32 %v1763, 0.0
    %v1828 = vmax.f32 %v1766, 0.0
    %v1829 = vmax.f32 %v1771, 0.0
    %v1830 = vmax.f32 %v1774, 0.0
    %v1831 = vmax.f32 %v1779, 0.0
    %v1832 = vmax.f32 %v1782, 0.0
    %v1833 = vld [vmem:[%s17] sm:$0x1]
    %v1835 = vlaneseq
    %v1836 = vshrl.u32 %v1835, 7
    %v1837 = vsub.s32 0, %v1836
    %v1838 = vrot.slane %v1833, %v1837
    %v1840 = vmul.f32 %v1785, %v1838
    %v1841 = vmul.f32 %v1786, %v1838
    %v1842 = vmul.f32 %v1787, %v1838
    %v1843 = vmul.f32 %v1788, %v1838
    %v1844 = vmul.f32 %v1789, %v1838
    %v1845 = vmul.f32 %v1790, %v1838
    %v1846 = vmul.f32 %v1791, %v1838
    %v1847 = vmul.f32 %v1792, %v1838
    %v1848 = vmul.f32 %v1793, %v1838
    %v1849 = vmul.f32 %v1794, %v1838
    %v1850 = vmul.f32 %v1795, %v1838
    %v1851 = vmul.f32 %v1796, %v1838
    %v1852 = vmul.f32 %v1797, %v1838
    %v1853 = vmul.f32 %v1798, %v1838
    %v1854 = vmul.f32 %v1799, %v1838
    %v1855 = vmul.f32 %v1800, %v1838
    %v1856 = vmul.f32 %v1801, %v1838
    %v1857 = vmul.f32 %v1802, %v1838
    %v1858 = vmul.f32 %v1803, %v1838
    %v1859 = vmul.f32 %v1804, %v1838
    %v1860 = vmul.f32 %v1805, %v1838
    %v1861 = vmul.f32 %v1806, %v1838
    %v1862 = vmul.f32 %v1807, %v1838
    %v1863 = vmul.f32 %v1808, %v1838
    %v1864 = vmul.f32 %v1809, %v1838
    %v1865 = vmul.f32 %v1810, %v1838
    %v1866 = vmul.f32 %v1811, %v1838
    %v1867 = vmul.f32 %v1812, %v1838
    %v1868 = vmul.f32 %v1813, %v1838
    %v1869 = vmul.f32 %v1814, %v1838
    %v1870 = vmul.f32 %v1815, %v1838
    %v1871 = vmul.f32 %v1816, %v1838
    %v1872 = vmul.f32 %v1817, %v1838
    %v1873 = vmul.f32 %v1818, %v1838
    %v1874 = vmul.f32 %v1819, %v1838
    %v1875 = vmul.f32 %v1820, %v1838
    %v1876 = vmul.f32 %v1821, %v1838
    %v1877 = vmul.f32 %v1822, %v1838
    %v1878 = vmul.f32 %v1823, %v1838
    %v1879 = vmul.f32 %v1824, %v1838
    %v1880 = vmul.f32 %v1825, %v1838
    %v1881 = vmul.f32 %v1826, %v1838
    %v1882 = vmul.f32 %v1827, %v1838
    %v1883 = vmul.f32 %v1828, %v1838
    %v1884 = vmul.f32 %v1829, %v1838
    %v1885 = vmul.f32 %v1830, %v1838
    %v1886 = vmul.f32 %v1831, %v1838
    %v1887 = vmul.f32 %v1832, %v1838
    %vm1888 = vcmask 130048
    %v1889 = vsel %vm1888, %v1840, 0.0
    %1890 = vadd.xlane.f32.xlu0 %v1889
    %v1891 = vpop.xlane.xlu0 %1890
    %v1892 = vsel %vm1888, %v1841, 0.0
    %1893 = vadd.xlane.f32.xlu0 %v1892
    %v1894 = vpop.xlane.xlu0 %1893
    %v1895 = vsel %vm1888, %v1842, 0.0
    %1896 = vadd.xlane.f32.xlu0 %v1895
    %v1897 = vpop.xlane.xlu0 %1896
    %v1898 = vsel %vm1888, %v1843, 0.0
    %1899 = vadd.xlane.f32.xlu0 %v1898
    %v1900 = vpop.xlane.xlu0 %1899
    %v1901 = vsel %vm1888, %v1844, 0.0
    %1902 = vadd.xlane.f32.xlu0 %v1901
    %v1903 = vpop.xlane.xlu0 %1902
    %v1904 = vsel %vm1888, %v1845, 0.0
    %1905 = vadd.xlane.f32.xlu0 %v1904
    %v1906 = vpop.xlane.xlu0 %1905
    %v1907 = vsel %vm1888, %v1846, 0.0
    %1908 = vadd.xlane.f32.xlu0 %v1907
    %v1909 = vpop.xlane.xlu0 %1908
    %v1910 = vsel %vm1888, %v1847, 0.0
    %1911 = vadd.xlane.f32.xlu0 %v1910
    %v1912 = vpop.xlane.xlu0 %1911
    %v1913 = vsel %vm1888, %v1848, 0.0
    %1914 = vadd.xlane.f32.xlu0 %v1913
    %v1915 = vpop.xlane.xlu0 %1914
    %v1916 = vsel %vm1888, %v1849, 0.0
    %1917 = vadd.xlane.f32.xlu0 %v1916
    %v1918 = vpop.xlane.xlu0 %1917
    %v1919 = vsel %vm1888, %v1850, 0.0
    %1920 = vadd.xlane.f32.xlu0 %v1919
    %v1921 = vpop.xlane.xlu0 %1920
    %v1922 = vsel %vm1888, %v1851, 0.0
    %1923 = vadd.xlane.f32.xlu0 %v1922
    %v1924 = vpop.xlane.xlu0 %1923
    %v1925 = vsel %vm1888, %v1852, 0.0
    %1926 = vadd.xlane.f32.xlu0 %v1925
    %v1927 = vpop.xlane.xlu0 %1926
    %v1928 = vsel %vm1888, %v1853, 0.0
    %1929 = vadd.xlane.f32.xlu0 %v1928
    %v1930 = vpop.xlane.xlu0 %1929
    %v1931 = vsel %vm1888, %v1854, 0.0
    %1932 = vadd.xlane.f32.xlu0 %v1931
    %v1933 = vpop.xlane.xlu0 %1932
    %v1934 = vsel %vm1888, %v1855, 0.0
    %1935 = vadd.xlane.f32.xlu0 %v1934
    %v1936 = vpop.xlane.xlu0 %1935
    %v1937 = vsel %vm1888, %v1856, 0.0
    %1938 = vadd.xlane.f32.xlu0 %v1937
    %v1939 = vpop.xlane.xlu0 %1938
    %v1940 = vsel %vm1888, %v1857, 0.0
    %1941 = vadd.xlane.f32.xlu0 %v1940
    %v1942 = vpop.xlane.xlu0 %1941
    %v1943 = vsel %vm1888, %v1858, 0.0
    %1944 = vadd.xlane.f32.xlu0 %v1943
    %v1945 = vpop.xlane.xlu0 %1944
    %v1946 = vsel %vm1888, %v1859, 0.0
    %1947 = vadd.xlane.f32.xlu0 %v1946
    %v1948 = vpop.xlane.xlu0 %1947
    %v1949 = vsel %vm1888, %v1860, 0.0
    %1950 = vadd.xlane.f32.xlu0 %v1949
    %v1951 = vpop.xlane.xlu0 %1950
    %v1952 = vsel %vm1888, %v1861, 0.0
    %1953 = vadd.xlane.f32.xlu0 %v1952
    %v1954 = vpop.xlane.xlu0 %1953
    %v1955 = vsel %vm1888, %v1862, 0.0
    %1956 = vadd.xlane.f32.xlu0 %v1955
    %v1957 = vpop.xlane.xlu0 %1956
    %v1958 = vsel %vm1888, %v1863, 0.0
    %1959 = vadd.xlane.f32.xlu0 %v1958
    %v1960 = vpop.xlane.xlu0 %1959
    %v1961 = vsel %vm1888, %v1864, 0.0
    %1962 = vadd.xlane.f32.xlu0 %v1961
    %v1963 = vpop.xlane.xlu0 %1962
    %v1964 = vsel %vm1888, %v1865, 0.0
    %1965 = vadd.xlane.f32.xlu0 %v1964
    %v1966 = vpop.xlane.xlu0 %1965
    %v1967 = vsel %vm1888, %v1866, 0.0
    %1968 = vadd.xlane.f32.xlu0 %v1967
    %v1969 = vpop.xlane.xlu0 %1968
    %v1970 = vsel %vm1888, %v1867, 0.0
    %1971 = vadd.xlane.f32.xlu0 %v1970
    %v1972 = vpop.xlane.xlu0 %1971
    %v1973 = vsel %vm1888, %v1868, 0.0
    %1974 = vadd.xlane.f32.xlu0 %v1973
    %v1975 = vpop.xlane.xlu0 %1974
    %v1976 = vsel %vm1888, %v1869, 0.0
    %1977 = vadd.xlane.f32.xlu0 %v1976
    %v1978 = vpop.xlane.xlu0 %1977
    %v1979 = vsel %vm1888, %v1870, 0.0
    %1980 = vadd.xlane.f32.xlu0 %v1979
    %v1981 = vpop.xlane.xlu0 %1980
    %v1982 = vsel %vm1888, %v1871, 0.0
    %1983 = vadd.xlane.f32.xlu0 %v1982
    %v1984 = vpop.xlane.xlu0 %1983
    %v1985 = vsel %vm1888, %v1872, 0.0
    %1986 = vadd.xlane.f32.xlu0 %v1985
    %v1987 = vpop.xlane.xlu0 %1986
    %v1988 = vsel %vm1888, %v1873, 0.0
    %1989 = vadd.xlane.f32.xlu0 %v1988
    %v1990 = vpop.xlane.xlu0 %1989
    %v1991 = vsel %vm1888, %v1874, 0.0
    %1992 = vadd.xlane.f32.xlu0 %v1991
    %v1993 = vpop.xlane.xlu0 %1992
    %v1994 = vsel %vm1888, %v1875, 0.0
    %1995 = vadd.xlane.f32.xlu0 %v1994
    %v1996 = vpop.xlane.xlu0 %1995
    %v1997 = vsel %vm1888, %v1876, 0.0
    %1998 = vadd.xlane.f32.xlu0 %v1997
    %v1999 = vpop.xlane.xlu0 %1998
    %v2000 = vsel %vm1888, %v1877, 0.0
    %2001 = vadd.xlane.f32.xlu0 %v2000
    %v2002 = vpop.xlane.xlu0 %2001
    %v2003 = vsel %vm1888, %v1878, 0.0
    %2004 = vadd.xlane.f32.xlu0 %v2003
    %v2005 = vpop.xlane.xlu0 %2004
    %v2006 = vsel %vm1888, %v1879, 0.0
    %2007 = vadd.xlane.f32.xlu0 %v2006
    %v2008 = vpop.xlane.xlu0 %2007
    %v2009 = vsel %vm1888, %v1880, 0.0
    %2010 = vadd.xlane.f32.xlu0 %v2009
    %v2011 = vpop.xlane.xlu0 %2010
    %v2012 = vsel %vm1888, %v1881, 0.0
    %2013 = vadd.xlane.f32.xlu0 %v2012
    %v2014 = vpop.xlane.xlu0 %2013
    %v2015 = vsel %vm1888, %v1882, 0.0
    %2016 = vadd.xlane.f32.xlu0 %v2015
    %v2017 = vpop.xlane.xlu0 %2016
    %v2018 = vsel %vm1888, %v1883, 0.0
    %2019 = vadd.xlane.f32.xlu0 %v2018
    %v2020 = vpop.xlane.xlu0 %2019
    %v2021 = vsel %vm1888, %v1884, 0.0
    %2022 = vadd.xlane.f32.xlu0 %v2021
    %v2023 = vpop.xlane.xlu0 %2022
    %v2024 = vsel %vm1888, %v1885, 0.0
    %2025 = vadd.xlane.f32.xlu0 %v2024
    %v2026 = vpop.xlane.xlu0 %2025
    %v2027 = vsel %vm1888, %v1886, 0.0
    %2028 = vadd.xlane.f32.xlu0 %v2027
    %v2029 = vpop.xlane.xlu0 %2028
    %v2030 = vsel %vm1888, %v1887, 0.0
    %2031 = vadd.xlane.f32.xlu0 %v2030
    %v2032 = vpop.xlane.xlu0 %2031
    %v2033 = vld [vmem:[#allocation3] sm:$0x1]
    %v2035 = vlaneseq
    %v2036 = vshrl.u32 %v2035, 7
    %v2037 = vsub.s32 0, %v2036
    %v2038 = vrot.slane %v2033, %v2037
    %2039 = vset.pattern.permute.xlu0 0
    %2040 = vperm.xlu0 %2039, %v2038
    %v2041 = vpop.permute.xlu0 %2040
    %v2043 = vadd.f32 %v1891, %v2041
    %v2044 = vadd.f32 %v1894, %v2041
    %v2045 = vadd.f32 %v1897, %v2041
    %v2046 = vadd.f32 %v1900, %v2041
    %v2047 = vadd.f32 %v1903, %v2041
    %v2048 = vadd.f32 %v1906, %v2041
    %v2049 = vadd.f32 %v1909, %v2041
    %v2050 = vadd.f32 %v1912, %v2041
    %v2051 = vadd.f32 %v1915, %v2041
    %v2052 = vadd.f32 %v1918, %v2041
    %v2053 = vadd.f32 %v1921, %v2041
    %v2054 = vadd.f32 %v1924, %v2041
    %v2055 = vadd.f32 %v1927, %v2041
    %v2056 = vadd.f32 %v1930, %v2041
    %v2057 = vadd.f32 %v1933, %v2041
    %v2058 = vadd.f32 %v1936, %v2041
    %v2059 = vadd.f32 %v1939, %v2041
    %v2060 = vadd.f32 %v1942, %v2041
    %v2061 = vadd.f32 %v1945, %v2041
    %v2062 = vadd.f32 %v1948, %v2041
    %v2063 = vadd.f32 %v1951, %v2041
    %v2064 = vadd.f32 %v1954, %v2041
    %v2065 = vadd.f32 %v1957, %v2041
    %v2066 = vadd.f32 %v1960, %v2041
    %v2067 = vadd.f32 %v1963, %v2041
    %v2068 = vadd.f32 %v1966, %v2041
    %v2069 = vadd.f32 %v1969, %v2041
    %v2070 = vadd.f32 %v1972, %v2041
    %v2071 = vadd.f32 %v1975, %v2041
    %v2072 = vadd.f32 %v1978, %v2041
    %v2073 = vadd.f32 %v1981, %v2041
    %v2074 = vadd.f32 %v1984, %v2041
    %v2075 = vadd.f32 %v1987, %v2041
    %v2076 = vadd.f32 %v1990, %v2041
    %v2077 = vadd.f32 %v1993, %v2041
    %v2078 = vadd.f32 %v1996, %v2041
    %v2079 = vadd.f32 %v1999, %v2041
    %v2080 = vadd.f32 %v2002, %v2041
    %v2081 = vadd.f32 %v2005, %v2041
    %v2082 = vadd.f32 %v2008, %v2041
    %v2083 = vadd.f32 %v2011, %v2041
    %v2084 = vadd.f32 %v2014, %v2041
    %v2085 = vadd.f32 %v2017, %v2041
    %v2086 = vadd.f32 %v2020, %v2041
    %v2087 = vadd.f32 %v2023, %v2041
    %v2088 = vadd.f32 %v2026, %v2041
    %v2089 = vadd.f32 %v2029, %v2041
    %v2090 = vadd.f32 %v2032, %v2041
    %v2091 = vmax.f32 %v2043, 0.0
    %v2092 = vmax.f32 %v2044, 0.0
    %v2093 = vmax.f32 %v2045, 0.0
    %v2094 = vmax.f32 %v2046, 0.0
    %v2095 = vmax.f32 %v2047, 0.0
    %v2096 = vmax.f32 %v2048, 0.0
    %v2097 = vmax.f32 %v2049, 0.0
    %v2098 = vmax.f32 %v2050, 0.0
    %v2099 = vmax.f32 %v2051, 0.0
    %v2100 = vmax.f32 %v2052, 0.0
    %v2101 = vmax.f32 %v2053, 0.0
    %v2102 = vmax.f32 %v2054, 0.0
    %v2103 = vmax.f32 %v2055, 0.0
    %v2104 = vmax.f32 %v2056, 0.0
    %v2105 = vmax.f32 %v2057, 0.0
    %v2106 = vmax.f32 %v2058, 0.0
    %v2107 = vmax.f32 %v2059, 0.0
    %v2108 = vmax.f32 %v2060, 0.0
    %v2109 = vmax.f32 %v2061, 0.0
    %v2110 = vmax.f32 %v2062, 0.0
    %v2111 = vmax.f32 %v2063, 0.0
    %v2112 = vmax.f32 %v2064, 0.0
    %v2113 = vmax.f32 %v2065, 0.0
    %v2114 = vmax.f32 %v2066, 0.0
    %v2115 = vmax.f32 %v2067, 0.0
    %v2116 = vmax.f32 %v2068, 0.0
    %v2117 = vmax.f32 %v2069, 0.0
    %v2118 = vmax.f32 %v2070, 0.0
    %v2119 = vmax.f32 %v2071, 0.0
    %v2120 = vmax.f32 %v2072, 0.0
    %v2121 = vmax.f32 %v2073, 0.0
    %v2122 = vmax.f32 %v2074, 0.0
    %v2123 = vmax.f32 %v2075, 0.0
    %v2124 = vmax.f32 %v2076, 0.0
    %v2125 = vmax.f32 %v2077, 0.0
    %v2126 = vmax.f32 %v2078, 0.0
    %v2127 = vmax.f32 %v2079, 0.0
    %v2128 = vmax.f32 %v2080, 0.0
    %v2129 = vmax.f32 %v2081, 0.0
    %v2130 = vmax.f32 %v2082, 0.0
    %v2131 = vmax.f32 %v2083, 0.0
    %v2132 = vmax.f32 %v2084, 0.0
    %v2133 = vmax.f32 %v2085, 0.0
    %v2134 = vmax.f32 %v2086, 0.0
    %v2135 = vmax.f32 %v2087, 0.0
    %v2136 = vmax.f32 %v2088, 0.0
    %v2137 = vmax.f32 %v2089, 0.0
    %v2138 = vmax.f32 %v2090, 0.0
    %v2187 = vlaneseq
    %v2188 = vand.u32 %v2187, 127
    %v2189 = vlaneseq
    %v2190 = vshrl.u32 %v2189, 7
    %v2191 = vsub.s32 %v2188, %v2190
    %v2192 = vrot.slane %v2091, %v2191
    %v2193 = vadd.s32 %v2188, 4294967288
    %v2194 = vlaneseq
    %v2195 = vshrl.u32 %v2194, 7
    %v2196 = vsub.s32 %v2193, %v2195
    %v2197 = vrot.slane %v2092, %v2196
    %vm2198 = vcmask 130112
    %v2199 = vsel %vm2198, %v2197, %v2192
    %v2200 = vadd.s32 %v2188, 4294967280
    %v2201 = vlaneseq
    %v2202 = vshrl.u32 %v2201, 7
    %v2203 = vsub.s32 %v2200, %v2202
    %v2204 = vrot.slane %v2093, %v2203
    %vm2205 = vcmask 195712
    %v2206 = vsel %vm2205, %v2204, %v2199
    %v2207 = vlaneseq
    %v2208 = vshrl.u32 %v2207, 7
    %v2209 = vsub.s32 %v2188, %v2208
    %v2210 = vrot.slane %v2094, %v2209
    %v2211 = vlaneseq
    %v2212 = vshrl.u32 %v2211, 7
    %v2213 = vsub.s32 %v2193, %v2212
    %v2214 = vrot.slane %v2095, %v2213
    %v2215 = vsel %vm2198, %v2214, %v2210
    %v2216 = vlaneseq
    %v2217 = vshrl.u32 %v2216, 7
    %v2218 = vsub.s32 %v2200, %v2217
    %v2219 = vrot.slane %v2096, %v2218
    %v2220 = vsel %vm2205, %v2219, %v2215
    %v2221 = vlaneseq
    %v2222 = vshrl.u32 %v2221, 7
    %v2223 = vsub.s32 %v2188, %v2222
    %v2224 = vrot.slane %v2097, %v2223
    %v2225 = vlaneseq
    %v2226 = vshrl.u32 %v2225, 7
    %v2227 = vsub.s32 %v2193, %v2226
    %v2228 = vrot.slane %v2098, %v2227
    %v2229 = vsel %vm2198, %v2228, %v2224
    %v2230 = vlaneseq
    %v2231 = vshrl.u32 %v2230, 7
    %v2232 = vsub.s32 %v2200, %v2231
    %v2233 = vrot.slane %v2099, %v2232
    %v2234 = vsel %vm2205, %v2233, %v2229
    %v2235 = vlaneseq
    %v2236 = vshrl.u32 %v2235, 7
    %v2237 = vsub.s32 %v2188, %v2236
    %v2238 = vrot.slane %v2100, %v2237
    %v2239 = vlaneseq
    %v2240 = vshrl.u32 %v2239, 7
    %v2241 = vsub.s32 %v2193, %v2240
    %v2242 = vrot.slane %v2101, %v2241
    %v2243 = vsel %vm2198, %v2242, %v2238
    %v2244 = vlaneseq
    %v2245 = vshrl.u32 %v2244, 7
    %v2246 = vsub.s32 %v2200, %v2245
    %v2247 = vrot.slane %v2102, %v2246
    %v2248 = vsel %vm2205, %v2247, %v2243
    %v2249 = vlaneseq
    %v2250 = vshrl.u32 %v2249, 7
    %v2251 = vsub.s32 %v2188, %v2250
    %v2252 = vrot.slane %v2103, %v2251
    %v2253 = vlaneseq
    %v2254 = vshrl.u32 %v2253, 7
    %v2255 = vsub.s32 %v2193, %v2254
    %v2256 = vrot.slane %v2104, %v2255
    %v2257 = vsel %vm2198, %v2256, %v2252
    %v2258 = vlaneseq
    %v2259 = vshrl.u32 %v2258, 7
    %v2260 = vsub.s32 %v2200, %v2259
    %v2261 = vrot.slane %v2105, %v2260
    %v2262 = vsel %vm2205, %v2261, %v2257
    %v2263 = vlaneseq
    %v2264 = vshrl.u32 %v2263, 7
    %v2265 = vsub.s32 %v2188, %v2264
    %v2266 = vrot.slane %v2106, %v2265
    %v2267 = vlaneseq
    %v2268 = vshrl.u32 %v2267, 7
    %v2269 = vsub.s32 %v2193, %v2268
    %v2270 = vrot.slane %v2107, %v2269
    %v2271 = vsel %vm2198, %v2270, %v2266
    %v2272 = vlaneseq
    %v2273 = vshrl.u32 %v2272, 7
    %v2274 = vsub.s32 %v2200, %v2273
    %v2275 = vrot.slane %v2108, %v2274
    %v2276 = vsel %vm2205, %v2275, %v2271
    %v2277 = vlaneseq
    %v2278 = vshrl.u32 %v2277, 7
    %v2279 = vsub.s32 %v2188, %v2278
    %v2280 = vrot.slane %v2109, %v2279
    %v2281 = vlaneseq
    %v2282 = vshrl.u32 %v2281, 7
    %v2283 = vsub.s32 %v2193, %v2282
    %v2284 = vrot.slane %v2110, %v2283
    %v2285 = vsel %vm2198, %v2284, %v2280
    %v2286 = vlaneseq
    %v2287 = vshrl.u32 %v2286, 7
    %v2288 = vsub.s32 %v2200, %v2287
    %v2289 = vrot.slane %v2111, %v2288
    %v2290 = vsel %vm2205, %v2289, %v2285
    %v2291 = vlaneseq
    %v2292 = vshrl.u32 %v2291, 7
    %v2293 = vsub.s32 %v2188, %v2292
    %v2294 = vrot.slane %v2112, %v2293
    %v2295 = vlaneseq
    %v2296 = vshrl.u32 %v2295, 7
    %v2297 = vsub.s32 %v2193, %v2296
    %v2298 = vrot.slane %v2113, %v2297
    %v2299 = vsel %vm2198, %v2298, %v2294
    %v2300 = vlaneseq
    %v2301 = vshrl.u32 %v2300, 7
    %v2302 = vsub.s32 %v2200, %v2301
    %v2303 = vrot.slane %v2114, %v2302
    %v2304 = vsel %vm2205, %v2303, %v2299
    %v2305 = vlaneseq
    %v2306 = vshrl.u32 %v2305, 7
    %v2307 = vsub.s32 %v2188, %v2306
    %v2308 = vrot.slane %v2115, %v2307
    %v2309 = vlaneseq
    %v2310 = vshrl.u32 %v2309, 7
    %v2311 = vsub.s32 %v2193, %v2310
    %v2312 = vrot.slane %v2116, %v2311
    %v2313 = vsel %vm2198, %v2312, %v2308
    %v2314 = vlaneseq
    %v2315 = vshrl.u32 %v2314, 7
    %v2316 = vsub.s32 %v2200, %v2315
    %v2317 = vrot.slane %v2117, %v2316
    %v2318 = vsel %vm2205, %v2317, %v2313
    %v2319 = vlaneseq
    %v2320 = vshrl.u32 %v2319, 7
    %v2321 = vsub.s32 %v2188, %v2320
    %v2322 = vrot.slane %v2118, %v2321
    %v2323 = vlaneseq
    %v2324 = vshrl.u32 %v2323, 7
    %v2325 = vsub.s32 %v2193, %v2324
    %v2326 = vrot.slane %v2119, %v2325
    %v2327 = vsel %vm2198, %v2326, %v2322
    %v2328 = vlaneseq
    %v2329 = vshrl.u32 %v2328, 7
    %v2330 = vsub.s32 %v2200, %v2329
    %v2331 = vrot.slane %v2120, %v2330
    %v2332 = vsel %vm2205, %v2331, %v2327
    %v2333 = vlaneseq
    %v2334 = vshrl.u32 %v2333, 7
    %v2335 = vsub.s32 %v2188, %v2334
    %v2336 = vrot.slane %v2121, %v2335
    %v2337 = vlaneseq
    %v2338 = vshrl.u32 %v2337, 7
    %v2339 = vsub.s32 %v2193, %v2338
    %v2340 = vrot.slane %v2122, %v2339
    %v2341 = vsel %vm2198, %v2340, %v2336
    %v2342 = vlaneseq
    %v2343 = vshrl.u32 %v2342, 7
    %v2344 = vsub.s32 %v2200, %v2343
    %v2345 = vrot.slane %v2123, %v2344
    %v2346 = vsel %vm2205, %v2345, %v2341
    %v2347 = vlaneseq
    %v2348 = vshrl.u32 %v2347, 7
    %v2349 = vsub.s32 %v2188, %v2348
    %v2350 = vrot.slane %v2124, %v2349
    %v2351 = vlaneseq
    %v2352 = vshrl.u32 %v2351, 7
    %v2353 = vsub.s32 %v2193, %v2352
    %v2354 = vrot.slane %v2125, %v2353
    %v2355 = vsel %vm2198, %v2354, %v2350
    %v2356 = vlaneseq
    %v2357 = vshrl.u32 %v2356, 7
    %v2358 = vsub.s32 %v2200, %v2357
    %v2359 = vrot.slane %v2126, %v2358
    %v2360 = vsel %vm2205, %v2359, %v2355
    %v2361 = vlaneseq
    %v2362 = vshrl.u32 %v2361, 7
    %v2363 = vsub.s32 %v2188, %v2362
    %v2364 = vrot.slane %v2127, %v2363
    %v2365 = vlaneseq
    %v2366 = vshrl.u32 %v2365, 7
    %v2367 = vsub.s32 %v2193, %v2366
    %v2368 = vrot.slane %v2128, %v2367
    %v2369 = vsel %vm2198, %v2368, %v2364
    %v2370 = vlaneseq
    %v2371 = vshrl.u32 %v2370, 7
    %v2372 = vsub.s32 %v2200, %v2371
    %v2373 = vrot.slane %v2129, %v2372
    %v2374 = vsel %vm2205, %v2373, %v2369
    %v2375 = vlaneseq
    %v2376 = vshrl.u32 %v2375, 7
    %v2377 = vsub.s32 %v2188, %v2376
    %v2378 = vrot.slane %v2130, %v2377
    %v2379 = vlaneseq
    %v2380 = vshrl.u32 %v2379, 7
    %v2381 = vsub.s32 %v2193, %v2380
    %v2382 = vrot.slane %v2131, %v2381
    %v2383 = vsel %vm2198, %v2382, %v2378
    %v2384 = vlaneseq
    %v2385 = vshrl.u32 %v2384, 7
    %v2386 = vsub.s32 %v2200, %v2385
    %v2387 = vrot.slane %v2132, %v2386
    %v2388 = vsel %vm2205, %v2387, %v2383
    %v2389 = vlaneseq
    %v2390 = vshrl.u32 %v2389, 7
    %v2391 = vsub.s32 %v2188, %v2390
    %v2392 = vrot.slane %v2133, %v2391
    %v2393 = vlaneseq
    %v2394 = vshrl.u32 %v2393, 7
    %v2395 = vsub.s32 %v2193, %v2394
    %v2396 = vrot.slane %v2134, %v2395
    %v2397 = vsel %vm2198, %v2396, %v2392
    %v2398 = vlaneseq
    %v2399 = vshrl.u32 %v2398, 7
    %v2400 = vsub.s32 %v2200, %v2399
    %v2401 = vrot.slane %v2135, %v2400
    %v2402 = vsel %vm2205, %v2401, %v2397
    %v2403 = vlaneseq
    %v2404 = vshrl.u32 %v2403, 7
    %v2405 = vsub.s32 %v2188, %v2404
    %v2406 = vrot.slane %v2136, %v2405
    %v2407 = vlaneseq
    %v2408 = vshrl.u32 %v2407, 7
    %v2409 = vsub.s32 %v2193, %v2408
    %v2410 = vrot.slane %v2137, %v2409
    %v2411 = vsel %vm2198, %v2410, %v2406
    %v2412 = vlaneseq
    %v2413 = vshrl.u32 %v2412, 7
    %v2414 = vsub.s32 %v2200, %v2413
    %v2415 = vrot.slane %v2138, %v2414
    %v2416 = vsel %vm2205, %v2415, %v2411
    %vm2417 = vcmask 1041409
    %v2418 = vsel %vm2417, %v2220, %v2206
    %vm2419 = vcmask 1042434
    %v2420 = vsel %vm2419, %v2234, %v2418
    %vm2421 = vcmask 1043459
    %v2422 = vsel %vm2421, %v2248, %v2420
    %vm2423 = vcmask 1044484
    %v2424 = vsel %vm2423, %v2262, %v2422
    %vm2425 = vcmask 1045509
    %v2426 = vsel %vm2425, %v2276, %v2424
    %vm2427 = vcmask 1046534
    %v2428 = vsel %vm2427, %v2290, %v2426
    %vm2429 = vcmask 1047559
    %v2430 = vsel %vm2429, %v2304, %v2428
    %v2431 = vsel %vm2417, %v2332, %v2318
    %v2432 = vsel %vm2419, %v2346, %v2431
    %v2433 = vsel %vm2421, %v2360, %v2432
    %v2434 = vsel %vm2423, %v2374, %v2433
    %v2435 = vsel %vm2425, %v2388, %v2434
    %v2436 = vsel %vm2427, %v2402, %v2435
    %v2437 = vsel %vm2429, %v2416, %v2436
    %vm2440 = vcmask 195584
    %2441 = vst.msk [vmem:[#allocation4] sm:$0xff] %vm2440, %v2430
    %2442 = vst.msk [vmem:[#allocation4 + $0x8] sm:$0xff] %vm2440, %v2437
    // Predicated region
    $region78: #{attentive_count_net2_forward.1} parent=1 // pred_check
      _
    $region79: #{attentive_count_net2_forward.1} parent=1 // pred_check_branch
      %2444 = sbr.rel (0) target = $region81
    $region80: #{attentive_count_net2_forward.1} parent=1 // pred_region
      %s2446 = ssub.s32 256, 256
      %2447 = vsyncadd [#allocation5], %s2446
      %s2448 = sshll.u32 [#allocation4], 4
      %s2449 = int_to_ptr.vmem [resolvable:$true] %s2448
      %2454 = dma.vmem_to_hbm [thread:$0]  %s2449, 256, %s19, [#allocation5], 128, 128, 8
    $region81: #{attentive_count_net2_forward.1} parent=1 // pred_fallthru
      _
    // Predicated region
    $region82: #{attentive_count_net2_forward.1} parent=1 // pred_check
      _
    $region83: #{attentive_count_net2_forward.1} parent=1 // pred_check_branch
      %2456 = sbr.rel (0) target = $region85
    $region84: #{attentive_count_net2_forward.1} parent=1 // pred_region
      %s2458 = ssub.s32 256, 256
      %2459 = vsyncadd [#allocation7], %s2458
      %s2460 = sshll.u32 [#allocation6], 4
      %s2461 = int_to_ptr.vmem [resolvable:$true] %s2460
      %2466 = dma.vmem_to_hbm [thread:$0]  %s2461, 256, %s20, [#allocation7], 128, 128, 8
    $region85: #{attentive_count_net2_forward.1} parent=1 // pred_fallthru
      _
    // Predicated region
    $region86: #{attentive_count_net2_forward.1} parent=1 // pred_check
      _
    $region87: #{attentive_count_net2_forward.1} parent=1 // pred_check_branch
      %2468 = sbr.rel (0) target = $region89
    $region88: #{attentive_count_net2_forward.1} parent=1 // pred_region
      %s2470 = ssub.s32 384, 384
      %2471 = vsyncadd [#allocation7], %s2470
      %s2472 = sshll.u32 [#allocation8], 4
      %s2473 = int_to_ptr.vmem [resolvable:$true] %s2472
      %2478 = dma.vmem_to_hbm [thread:$0]  %s2473, 384, %s21, [#allocation7], 128, 128, 8
    $region89: #{attentive_count_net2_forward.1} parent=1 // pred_fallthru
      _
    // Predicated region
    $region90: #{attentive_count_net2_forward.1} parent=1 // pred_check
      _
    $region91: #{attentive_count_net2_forward.1} parent=1 // pred_check_branch
      %2480 = sbr.rel (0) target = $region93
    $region92: #{attentive_count_net2_forward.1} parent=1 // pred_region
      %2481 = dma.done [#allocation5], 256
    $region93: #{attentive_count_net2_forward.1} parent=1 // pred_fallthru
      _
    // Predicated region
    $region94: #{attentive_count_net2_forward.1} parent=1 // pred_check
      _
    $region95: #{attentive_count_net2_forward.1} parent=1 // pred_check_branch
      %2483 = sbr.rel (0) target = $region97
    $region96: #{attentive_count_net2_forward.1} parent=1 // pred_region
      %2484 = dma.done [#allocation7], 256
    $region97: #{attentive_count_net2_forward.1} parent=1 // pred_fallthru
      _
    // Predicated region
    $region98: #{attentive_count_net2_forward.1} parent=1 // pred_check
      _
    $region99: #{attentive_count_net2_forward.1} parent=1 // pred_check_branch
      %2486 = sbr.rel (0) target = $region101
    $region100: #{attentive_count_net2_forward.1} parent=1 // pred_region
      %2487 = dma.done [#allocation7], 384
    $region101: #{attentive_count_net2_forward.1} parent=1 // pred_fallthru
      _
    %2488 = vsyncpa [#allocation5], 1
    %2489 = vsyncpa [#allocation7], 1

</llo_original>
